<compile_context>
chip_gen: v5e
topology: v5e:2x2
jax: 0.10.0
libtpu: 0.0.40
codegen_flags: <defaults>
</compile_context>

<pallas_src>
import jax
import jax.numpy as jnp
import numpy as np
from jax import lax
from jax.experimental import pallas as pl
from jax.experimental.pallas import tpu as pltpu

_BN_EPS = 1e-5
_LANE = 128


def _round_up(x, m):
    return ((x + m - 1) // m) * m


def _vmem_limit_bytes():
    """Generation-aware VMEM budget (v5e/v6e: 128 MiB, v7x: 64 MiB physical)."""
    try:
        cap = int(pltpu.get_tpu_info().vmem_capacity_bytes)
    except Exception:
        cap = 64 * 1024 * 1024
    return max(min(cap * 3 // 4, 100 * 1024 * 1024), 32 * 1024 * 1024)


# ----------------------------- Pallas kernel -------------------------------- #
def _make_resblock_kernel(Ci, Co, Ho, Wo, stride, has_projection, Hp2, W2P):
    """One grid step = one batch element; channels already lane-padded to 128."""
    f32 = jnp.float32
    bf16 = jnp.bfloat16

    def kernel(*refs):
        if has_projection:
            (x_ref, w1_ref, sb1_ref, w2_ref, sb2_ref, wcs_ref, sbsc_ref,
             o_ref, pad2) = refs
        else:
            (x_ref, w1_ref, sb1_ref, w2_ref, sb2_ref, o_ref, pad2) = refs
            wcs_ref = sbsc_ref = None

        # ---- conv1 tap windows (all contiguous; padding / stride-2 phase
        #      decimation already done in the wrapper) ----
        if stride == 1:
            def tap1(dy, dx):
                return x_ref[dy:dy + Ho, dx:dx + Wo, :]
        else:
            def tap1(dy, dx):
                r0 = ((dy % 2) * 2 + (dx % 2)) * Hp2 + dy // 2
                c0 = dx // 2
                return x_ref[r0:r0 + Ho, c0:c0 + Wo, :]

        # ---- conv1: 8 off-center taps as accumulated K=Ci matmuls ----
        acc1 = None
        for dy in range(3):
            for dx in range(3):
                if dy == 1 and dx == 1:
                    continue
                k = dy * 3 + dx
                lhs = tap1(dy, dx).reshape(Ho * Wo, Ci).astype(bf16)
                c = jnp.dot(lhs, w1_ref[k * Ci:(k + 1) * Ci, :],
                            preferred_element_type=f32)
                acc1 = c if acc1 is None else acc1 + c

        # ---- center tap (optionally fused with the 1x1 projection shortcut) ----
        center = tap1(1, 1).reshape(Ho * Wo, Ci)             # f32 values of x
        if has_projection:
            # RHS = [w1_center | wsc]  (Ci, 2*Co): fills the 256-wide MXU.
            acc_cs = jnp.dot(center.astype(bf16), wcs_ref[...],
                             preferred_element_type=f32)      # (Ho*Wo, 2*Co)
            acc1 = acc1 + acc_cs[:, :Co]
            sc = acc_cs[:, Co:] * sbsc_ref[0:1, :] + sbsc_ref[1:2, :]
        else:
            acc1 = acc1 + jnp.dot(center.astype(bf16), w1_ref[4 * Ci:5 * Ci, :],
                                  preferred_element_type=f32)
            sc = center                                        # exact identity path

        out1 = jnp.maximum(acc1 * sb1_ref[0:1, :] + sb1_ref[1:2, :], 0.0)

        # ---- stage out1 with a 1-pixel zero halo for conv2 (per-step halo
        #      zeroing: safe when the batch axis is sharded across cores) ----
        pad2[0:1, :, :] = jnp.zeros((1, W2P, Co), f32)
        pad2[Ho + 1:Ho + 2, :, :] = jnp.zeros((1, W2P, Co), f32)
        pad2[:, 0:1, :] = jnp.zeros((Ho + 2, 1, Co), f32)
        pad2[:, Wo + 1:Wo + 2, :] = jnp.zeros((Ho + 2, 1, Co), f32)
        pad2[1:Ho + 1, 1:Wo + 1, :] = out1.reshape(Ho, Wo, Co)

        # ---- conv2: stride 1, pad 1 — 9 accumulated K=Co matmuls ----
        acc2 = None
        for dy in range(3):
            for dx in range(3):
                k = dy * 3 + dx
                lhs = pad2[dy:dy + Ho, dx:dx + Wo, :].reshape(Ho * Wo, Co).astype(bf16)
                c = jnp.dot(lhs, w2_ref[k * Co:(k + 1) * Co, :],
                            preferred_element_type=f32)
                acc2 = c if acc2 is None else acc2 + c

        out2 = acc2 * sb2_ref[0:1, :] + sb2_ref[1:2, :]
        out = jnp.maximum(out2 + sc, 0.0)
        o_ref[...] = out.reshape(Ho, Wo, Co).astype(o_ref.dtype)

    return kernel


# ------------------------------- wrapper ------------------------------------ #
def residual_block_forward(x_nchw, params, stride):
    """x_nchw: (N, Cin, H, W) float32 (PyTorch convention). Returns NCHW."""
    x = jnp.transpose(x_nchw, (0, 2, 3, 1)).astype(jnp.float32)    # -> NHWC
    N, H, W, Cin = x.shape
    Cout = params["w1"].shape[-1]
    has_projection = params["wsc"] is not None

    Ci = _round_up(Cin, _LANE)
    Co = _round_up(Cout, _LANE)
    Ho = (H + 2 - 3) // stride + 1
    Wo = (W + 2 - 3) // stride + 1

    # ---- conv1 spatial halo + lane-dense channel padding, done once here ----
    xp = jnp.pad(x, ((0, 0), (1, 1), (1, 1), (0, Ci - Cin)))       # (N,H+2,W+2,Ci)

    Hp2 = 0
    if stride == 1:
        Wq = _round_up(W + 2, 8)                                   # sublane-aligned
        xp = jnp.pad(xp, ((0, 0), (0, 0), (0, Wq - (W + 2)), (0, 0)))
        x_shape = (N, H + 2, Wq, Ci)
    else:
        # Pre-decimate the padded input into its 4 stride-2 phases, stacked
        # phase-major along rows: row block p = 2*(dy%2)+(dx%2) holds
        # x_pad[dy%2::2, dx%2::2, :].  The kernel then uses only contiguous
        # slices (no strided in-kernel loads).
        Hp = _round_up(H + 2, 2)
        Hp2 = Hp // 2
        Wp2 = _round_up((W + 2 + 1) // 2, 8)
        Wp = 2 * Wp2
        xp = jnp.pad(xp, ((0, 0), (0, Hp - (H + 2)), (0, Wp - (W + 2)), (0, 0)))
        xp = xp.reshape(N, Hp2, 2, Wp2, 2, Ci)                     # (n,r,a,c,b,ci)
        xp = jnp.transpose(xp, (0, 2, 4, 1, 3, 5))                 # (n,a,b,r,c,ci)
        xp = xp.reshape(N, 4 * Hp2, Wp2, Ci)
        x_shape = (N, 4 * Hp2, Wp2, Ci)

    # ---- weight / BN-param packing (padded channels: zero weights, scale=1,
    #      shift=0, so padded lanes stay exactly zero through the block) ----
    def pad_w(w, ci, co):                                    # (kh,kw,cin,cout) padded
        return jnp.pad(w, ((0, 0), (0, 0), (0, ci - w.shape[2]), (0, co - w.shape[3])))

    def pad_sb(sb, co):                                      # (2,cout) -> (2,co)
        pad = co - sb.shape[1]
        scale = jnp.pad(sb[0], (0, pad), constant_values=1.0)
        shift = jnp.pad(sb[1], (0, pad), constant_values=0.0)
        return jnp.stack([scale, shift]).astype(jnp.float32)

    w1p = pad_w(params["w1"], Ci, Co)                        # (3,3,Ci,Co)
    w1 = w1p.reshape(9 * Ci, Co).astype(jnp.bfloat16)        # per-tap slab
    w2 = pad_w(params["w2"], Co, Co).reshape(9 * Co, Co).astype(jnp.bfloat16)
    sb1 = pad_sb(params["sb1"], Co)
    sb2 = pad_sb(params["sb2"], Co)

    in_specs = [
        pl.BlockSpec((None,) + x_shape[1:], lambda b: (b, 0, 0, 0)),   # x (padded)
        pl.BlockSpec((9 * Ci, Co), lambda b: (0, 0)),                  # w1 tap slab
        pl.BlockSpec((2, Co), lambda b: (0, 0)),                       # bn1 scale/shift
        pl.BlockSpec((9 * Co, Co), lambda b: (0, 0)),                  # w2 tap slab
        pl.BlockSpec((2, Co), lambda b: (0, 0)),                       # bn2 scale/shift
    ]
    args = [xp, w1, sb1, w2, sb2]
    if has_projection:
        wscp = pad_w(params["wsc"], Ci, Co)                            # (1,1,Ci,Co)
        wcs = jnp.concatenate([w1p[1, 1], wscp[0, 0]], axis=1).astype(jnp.bfloat16)
        sbsc = pad_sb(params["sbsc"], Co)
        in_specs += [pl.BlockSpec((Ci, 2 * Co), lambda b: (0, 0)),     # [w1_c | wsc]
                     pl.BlockSpec((2, Co), lambda b: (0, 0))]          # bn_sc
        args += [wcs, sbsc]

    W2P = _round_up(Wo + 2, 8)
    kernel = _make_resblock_kernel(Ci, Co, Ho, Wo, stride, has_projection, Hp2, W2P)

    out_p = pl.pallas_call(
        kernel,
        out_shape=jax.ShapeDtypeStruct((N, Ho, Wo, Co), jnp.float32),
        grid_spec=pltpu.PrefetchScalarGridSpec(
            num_scalar_prefetch=0,
            grid=(N,),
            in_specs=in_specs,
            out_specs=pl.BlockSpec((None, Ho, Wo, Co), lambda b: (b, 0, 0, 0)),
            scratch_shapes=[
                pltpu.VMEM((Ho + 2, W2P, Co), jnp.float32),            # conv2 halo stage
            ],
        ),
        compiler_params=pltpu.CompilerParams(
            dimension_semantics=("parallel",),         # batch axis -> 2-TC on v7x
            vmem_limit_bytes=_vmem_limit_bytes(),
        ),
    )(*args)

    out = out_p[:, :, :, :Cout]                               # drop lane padding
    return jnp.transpose(out, (0, 3, 1, 2))                   # back to NCHW


# ----------------------- deterministic parameter setup ---------------------- #
def init_params(key, in_channels, out_channels, stride):
    def conv_p(k, kh, kw, cin, cout):
        kw_, kb = jax.random.split(k)
        return {"w": 0.2 * jax.random.normal(kw_, (kh, kw, cin, cout), jnp.float32),
                "b": 0.1 * jax.random.normal(kb, (cout,), jnp.float32)}

    def bn_p(k, c):
        k1, k2, k3, k4 = jax.random.split(k, 4)
        return {"gamma": 1.0 + 0.1 * jax.random.normal(k1, (c,), jnp.float32),
                "beta": 0.1 * jax.random.normal(k2, (c,), jnp.float32),
                "mean": 0.1 * jax.random.normal(k3, (c,), jnp.float32),
                "var": 0.5 + jax.random.uniform(k4, (c,), jnp.float32)}

    k1, k2, k3, k4, k5, k6 = jax.random.split(key, 6)
    raw = {"conv1": conv_p(k1, 3, 3, in_channels, out_channels),
           "bn1": bn_p(k2, out_channels),
           "conv2": conv_p(k3, 3, 3, out_channels, out_channels),
           "bn2": bn_p(k4, out_channels),
           "shortcut": None}
    if stride != 1 or in_channels != out_channels:
        raw["shortcut"] = {"conv": conv_p(k5, 1, 1, in_channels, out_channels),
                           "bn": bn_p(k6, out_channels)}
    return raw


def _fold_bn(conv_bias, gamma, beta, mean, var):
    scale = gamma / jnp.sqrt(var + _BN_EPS)
    shift = beta + scale * (conv_bias - mean)
    return jnp.stack([scale, shift]).astype(jnp.float32)            # (2, Cout)


def fold_params(raw):
    p = {"w1": raw["conv1"]["w"],
         "sb1": _fold_bn(raw["conv1"]["b"], **raw["bn1"]),
         "w2": raw["conv2"]["w"],
         "sb2": _fold_bn(raw["conv2"]["b"], **raw["bn2"])}
    if raw["shortcut"] is None:
        p["wsc"] = None
        p["sbsc"] = None
    else:
        p["wsc"] = raw["shortcut"]["conv"]["w"]
        p["sbsc"] = _fold_bn(raw["shortcut"]["conv"]["b"], **raw["shortcut"]["bn"])
    return p


# ------------------------------ pure-JAX reference --------------------------- #
def ref_forward(x_nchw, raw, stride):
    x = jnp.transpose(x_nchw, (0, 2, 3, 1)).astype(jnp.float32)

    def conv(h, cp, s, pad):
        y = lax.conv_general_dilated(
            h, cp["w"], (s, s), [(pad, pad), (pad, pad)],
            dimension_numbers=("NHWC", "HWIO", "NHWC"),
            precision=lax.Precision.HIGHEST)
        return y + cp["b"]

    def bn(h, bp):
        return (h - bp["mean"]) / jnp.sqrt(bp["var"] + _BN_EPS) * bp["gamma"] + bp["beta"]

    out = jnp.maximum(bn(conv(x, raw["conv1"], stride, 1), raw["bn1"]), 0.0)
    out = bn(conv(out, raw["conv2"], 1, 1), raw["bn2"])
    if raw["shortcut"] is None:
        sc = x
    else:
        sc = bn(conv(x, raw["shortcut"]["conv"], stride, 0), raw["shortcut"]["bn"])
    out = jnp.maximum(out + sc, 0.0)
    return jnp.transpose(out, (0, 3, 1, 2))


# ---------------------------------- main ------------------------------------- #
if __name__ == "__main__":
    key = jax.random.PRNGKey(0)
    kx, kp1, kp2 = jax.random.split(key, 3)

    # PyTorch-convention NCHW input
    x = jax.random.normal(kx, (2, 4, 16, 16), jnp.float32)

    # Case 1: projection shortcut (stride=2, in_channels != out_channels)
    raw1 = init_params(kp1, 4, 8, 2)
    p1 = fold_params(raw1)
    out1 = jax.block_until_ready(residual_block_forward(x, p1, stride=2))
    ref1 = ref_forward(x, raw1, 2)
    assert out1.shape == (2, 8, 8, 8)
    np.testing.assert_allclose(np.asarray(out1), np.asarray(ref1),
                               rtol=2e-2, atol=2e-2)   # bf16 MXU vs f32 reference

    # Case 2: identity shortcut (stride=1, in_channels == out_channels)
    raw2 = init_params(kp2, 4, 4, 1)
    p2 = fold_params(raw2)
    out2 = jax.block_until_ready(residual_block_forward(x, p2, stride=1))
    ref2 = ref_forward(x, raw2, 1)
    assert out2.shape == (2, 4, 16, 16)
    np.testing.assert_allclose(np.asarray(out2), np.asarray(ref2),
                               rtol=2e-2, atol=2e-2)

    print("KERNEL_OK")
</pallas_src>

<mosaic_0001>
module attributes {stable_mosaic.version = 11 : i64} {
  func.func @kernel(%arg0: i32, %arg1: memref<1x36x16x128xf32, #tpu.memory_space<vmem>>, %arg2: memref<1152x128xbf16, #tpu.memory_space<vmem>>, %arg3: memref<2x128xf32, #tpu.memory_space<vmem>>, %arg4: memref<1152x128xbf16, #tpu.memory_space<vmem>>, %arg5: memref<2x128xf32, #tpu.memory_space<vmem>>, %arg6: memref<128x256xbf16, #tpu.memory_space<vmem>>, %arg7: memref<2x128xf32, #tpu.memory_space<vmem>>, %arg8: memref<1x8x8x128xf32, #tpu.memory_space<vmem>>, %arg9: memref<10x16x128xf32, #tpu.memory_space<vmem>>) attributes {dimension_semantics = [#tpu.dimension_semantics<parallel>], iteration_bounds = array<i64: 2>, scalar_prefetch = 0 : i64, scratch_operands = 1 : i64, tpu.core_type = #tpu.core_type<tc>, window_params = [{transform_indices = @transform_0, window_bounds = array<i64: 1, 36, 16, 128>}, {pipeline_mode = #tpu.pipeline_mode<synchronous>, transform_indices = @transform_1, window_bounds = array<i64: 1152, 128>}, {pipeline_mode = #tpu.pipeline_mode<synchronous>, transform_indices = @transform_2, window_bounds = array<i64: 2, 128>}, {pipeline_mode = #tpu.pipeline_mode<synchronous>, transform_indices = @transform_3, window_bounds = array<i64: 1152, 128>}, {pipeline_mode = #tpu.pipeline_mode<synchronous>, transform_indices = @transform_4, window_bounds = array<i64: 2, 128>}, {pipeline_mode = #tpu.pipeline_mode<synchronous>, transform_indices = @transform_5, window_bounds = array<i64: 128, 256>}, {pipeline_mode = #tpu.pipeline_mode<synchronous>, transform_indices = @transform_6, window_bounds = array<i64: 2, 128>}, {transform_indices = @transform_7, window_bounds = array<i64: 1, 8, 8, 128>}]} {
    %c0 = arith.constant 0 : index
    %c0_0 = arith.constant 0 : index
    %c0_1 = arith.constant 0 : index
    %c0_2 = arith.constant 0 : index
    %0 = vector.load %arg1[%c0, %c0_0, %c0_1, %c0_2] : memref<1x36x16x128xf32, #tpu.memory_space<vmem>>, vector<1x8x8x128xf32>
    %1 = vector.shape_cast %0 : vector<1x8x8x128xf32> to vector<8x8x128xf32>
    %2 = vector.shape_cast %1 : vector<8x8x128xf32> to vector<64x128xf32>
    %3 = arith.truncf %2 : vector<64x128xf32> to vector<64x128xbf16>
    %c0_3 = arith.constant 0 : index
    %c0_4 = arith.constant 0 : index
    %4 = vector.load %arg2[%c0_3, %c0_4] : memref<1152x128xbf16, #tpu.memory_space<vmem>>, vector<128x128xbf16>
    %cst = arith.constant dense<0.000000e+00> : vector<64x128xf32>
    %5 = tpu.matmul %3, %4, %cst {dimension_numbers = #tpu.dot_dimension_numbers<[1], [0], [0], [1], [0, 0, 1, 1], [], []>} : vector<64x128xbf16>, vector<128x128xbf16>, vector<64x128xf32> -> vector<64x128xf32>
    %c0_5 = arith.constant 0 : index
    %c9 = arith.constant 9 : index
    %c0_6 = arith.constant 0 : index
    %c0_7 = arith.constant 0 : index
    %6 = vector.load %arg1[%c0_5, %c9, %c0_6, %c0_7] : memref<1x36x16x128xf32, #tpu.memory_space<vmem>>, vector<1x8x8x128xf32>
    %7 = vector.shape_cast %6 : vector<1x8x8x128xf32> to vector<8x8x128xf32>
    %8 = vector.shape_cast %7 : vector<8x8x128xf32> to vector<64x128xf32>
    %9 = arith.truncf %8 : vector<64x128xf32> to vector<64x128xbf16>
    %c128 = arith.constant 128 : index
    %c0_8 = arith.constant 0 : index
    %10 = vector.load %arg2[%c128, %c0_8] : memref<1152x128xbf16, #tpu.memory_space<vmem>>, vector<128x128xbf16>
    %cst_9 = arith.constant dense<0.000000e+00> : vector<64x128xf32>
    %11 = tpu.matmul %9, %10, %cst_9 {dimension_numbers = #tpu.dot_dimension_numbers<[1], [0], [0], [1], [0, 0, 1, 1], [], []>} : vector<64x128xbf16>, vector<128x128xbf16>, vector<64x128xf32> -> vector<64x128xf32>
    %12 = arith.addf %5, %11 : vector<64x128xf32>
    %c0_10 = arith.constant 0 : index
    %c0_11 = arith.constant 0 : index
    %c1 = arith.constant 1 : index
    %c0_12 = arith.constant 0 : index
    %13 = vector.load %arg1[%c0_10, %c0_11, %c1, %c0_12] : memref<1x36x16x128xf32, #tpu.memory_space<vmem>>, vector<1x8x8x128xf32>
    %14 = vector.shape_cast %13 : vector<1x8x8x128xf32> to vector<8x8x128xf32>
    %15 = vector.shape_cast %14 : vector<8x8x128xf32> to vector<64x128xf32>
    %16 = arith.truncf %15 : vector<64x128xf32> to vector<64x128xbf16>
    %c256 = arith.constant 256 : index
    %c0_13 = arith.constant 0 : index
    %17 = vector.load %arg2[%c256, %c0_13] : memref<1152x128xbf16, #tpu.memory_space<vmem>>, vector<128x128xbf16>
    %cst_14 = arith.constant dense<0.000000e+00> : vector<64x128xf32>
    %18 = tpu.matmul %16, %17, %cst_14 {dimension_numbers = #tpu.dot_dimension_numbers<[1], [0], [0], [1], [0, 0, 1, 1], [], []>} : vector<64x128xbf16>, vector<128x128xbf16>, vector<64x128xf32> -> vector<64x128xf32>
    %19 = arith.addf %12, %18 : vector<64x128xf32>
    %c0_15 = arith.constant 0 : index
    %c18 = arith.constant 18 : index
    %c0_16 = arith.constant 0 : index
    %c0_17 = arith.constant 0 : index
    %20 = vector.load %arg1[%c0_15, %c18, %c0_16, %c0_17] : memref<1x36x16x128xf32, #tpu.memory_space<vmem>>, vector<1x8x8x128xf32>
    %21 = vector.shape_cast %20 : vector<1x8x8x128xf32> to vector<8x8x128xf32>
    %22 = vector.shape_cast %21 : vector<8x8x128xf32> to vector<64x128xf32>
    %23 = arith.truncf %22 : vector<64x128xf32> to vector<64x128xbf16>
    %c384 = arith.constant 384 : index
    %c0_18 = arith.constant 0 : index
    %24 = vector.load %arg2[%c384, %c0_18] : memref<1152x128xbf16, #tpu.memory_space<vmem>>, vector<128x128xbf16>
    %cst_19 = arith.constant dense<0.000000e+00> : vector<64x128xf32>
    %25 = tpu.matmul %23, %24, %cst_19 {dimension_numbers = #tpu.dot_dimension_numbers<[1], [0], [0], [1], [0, 0, 1, 1], [], []>} : vector<64x128xbf16>, vector<128x128xbf16>, vector<64x128xf32> -> vector<64x128xf32>
    %26 = arith.addf %19, %25 : vector<64x128xf32>
    %c0_20 = arith.constant 0 : index
    %c18_21 = arith.constant 18 : index
    %c1_22 = arith.constant 1 : index
    %c0_23 = arith.constant 0 : index
    %27 = vector.load %arg1[%c0_20, %c18_21, %c1_22, %c0_23] : memref<1x36x16x128xf32, #tpu.memory_space<vmem>>, vector<1x8x8x128xf32>
    %28 = vector.shape_cast %27 : vector<1x8x8x128xf32> to vector<8x8x128xf32>
    %29 = vector.shape_cast %28 : vector<8x8x128xf32> to vector<64x128xf32>
    %30 = arith.truncf %29 : vector<64x128xf32> to vector<64x128xbf16>
    %c640 = arith.constant 640 : index
    %c0_24 = arith.constant 0 : index
    %31 = vector.load %arg2[%c640, %c0_24] : memref<1152x128xbf16, #tpu.memory_space<vmem>>, vector<128x128xbf16>
    %cst_25 = arith.constant dense<0.000000e+00> : vector<64x128xf32>
    %32 = tpu.matmul %30, %31, %cst_25 {dimension_numbers = #tpu.dot_dimension_numbers<[1], [0], [0], [1], [0, 0, 1, 1], [], []>} : vector<64x128xbf16>, vector<128x128xbf16>, vector<64x128xf32> -> vector<64x128xf32>
    %33 = arith.addf %26, %32 : vector<64x128xf32>
    %c0_26 = arith.constant 0 : index
    %c1_27 = arith.constant 1 : index
    %c0_28 = arith.constant 0 : index
    %c0_29 = arith.constant 0 : index
    %34 = vector.load %arg1[%c0_26, %c1_27, %c0_28, %c0_29] : memref<1x36x16x128xf32, #tpu.memory_space<vmem>>, vector<1x8x8x128xf32>
    %35 = vector.shape_cast %34 : vector<1x8x8x128xf32> to vector<8x8x128xf32>
    %36 = vector.shape_cast %35 : vector<8x8x128xf32> to vector<64x128xf32>
    %37 = arith.truncf %36 : vector<64x128xf32> to vector<64x128xbf16>
    %c768 = arith.constant 768 : index
    %c0_30 = arith.constant 0 : index
    %38 = vector.load %arg2[%c768, %c0_30] : memref<1152x128xbf16, #tpu.memory_space<vmem>>, vector<128x128xbf16>
    %cst_31 = arith.constant dense<0.000000e+00> : vector<64x128xf32>
    %39 = tpu.matmul %37, %38, %cst_31 {dimension_numbers = #tpu.dot_dimension_numbers<[1], [0], [0], [1], [0, 0, 1, 1], [], []>} : vector<64x128xbf16>, vector<128x128xbf16>, vector<64x128xf32> -> vector<64x128xf32>
    %40 = arith.addf %33, %39 : vector<64x128xf32>
    %c0_32 = arith.constant 0 : index
    %c10 = arith.constant 10 : index
    %c0_33 = arith.constant 0 : index
    %c0_34 = arith.constant 0 : index
    %41 = vector.load %arg1[%c0_32, %c10, %c0_33, %c0_34] : memref<1x36x16x128xf32, #tpu.memory_space<vmem>>, vector<1x8x8x128xf32>
    %42 = vector.shape_cast %41 : vector<1x8x8x128xf32> to vector<8x8x128xf32>
    %43 = vector.shape_cast %42 : vector<8x8x128xf32> to vector<64x128xf32>
    %44 = arith.truncf %43 : vector<64x128xf32> to vector<64x128xbf16>
    %c896 = arith.constant 896 : index
    %c0_35 = arith.constant 0 : index
    %45 = vector.load %arg2[%c896, %c0_35] : memref<1152x128xbf16, #tpu.memory_space<vmem>>, vector<128x128xbf16>
    %cst_36 = arith.constant dense<0.000000e+00> : vector<64x128xf32>
    %46 = tpu.matmul %44, %45, %cst_36 {dimension_numbers = #tpu.dot_dimension_numbers<[1], [0], [0], [1], [0, 0, 1, 1], [], []>} : vector<64x128xbf16>, vector<128x128xbf16>, vector<64x128xf32> -> vector<64x128xf32>
    %47 = arith.addf %40, %46 : vector<64x128xf32>
    %c0_37 = arith.constant 0 : index
    %c1_38 = arith.constant 1 : index
    %c1_39 = arith.constant 1 : index
    %c0_40 = arith.constant 0 : index
    %48 = vector.load %arg1[%c0_37, %c1_38, %c1_39, %c0_40] : memref<1x36x16x128xf32, #tpu.memory_space<vmem>>, vector<1x8x8x128xf32>
    %49 = vector.shape_cast %48 : vector<1x8x8x128xf32> to vector<8x8x128xf32>
    %50 = vector.shape_cast %49 : vector<8x8x128xf32> to vector<64x128xf32>
    %51 = arith.truncf %50 : vector<64x128xf32> to vector<64x128xbf16>
    %c1024 = arith.constant 1024 : index
    %c0_41 = arith.constant 0 : index
    %52 = vector.load %arg2[%c1024, %c0_41] : memref<1152x128xbf16, #tpu.memory_space<vmem>>, vector<128x128xbf16>
    %cst_42 = arith.constant dense<0.000000e+00> : vector<64x128xf32>
    %53 = tpu.matmul %51, %52, %cst_42 {dimension_numbers = #tpu.dot_dimension_numbers<[1], [0], [0], [1], [0, 0, 1, 1], [], []>} : vector<64x128xbf16>, vector<128x128xbf16>, vector<64x128xf32> -> vector<64x128xf32>
    %54 = arith.addf %47, %53 : vector<64x128xf32>
    %c0_43 = arith.constant 0 : index
    %c27 = arith.constant 27 : index
    %c0_44 = arith.constant 0 : index
    %c0_45 = arith.constant 0 : index
    %55 = vector.load %arg1[%c0_43, %c27, %c0_44, %c0_45] : memref<1x36x16x128xf32, #tpu.memory_space<vmem>>, vector<1x8x8x128xf32>
    %56 = vector.shape_cast %55 : vector<1x8x8x128xf32> to vector<8x8x128xf32>
    %57 = vector.shape_cast %56 : vector<8x8x128xf32> to vector<64x128xf32>
    %58 = arith.truncf %57 : vector<64x128xf32> to vector<64x128xbf16>
    %c0_46 = arith.constant 0 : index
    %c0_47 = arith.constant 0 : index
    %59 = vector.load %arg6[%c0_46, %c0_47] : memref<128x256xbf16, #tpu.memory_space<vmem>>, vector<128x256xbf16>
    %cst_48 = arith.constant dense<0.000000e+00> : vector<64x256xf32>
    %60 = tpu.matmul %58, %59, %cst_48 {dimension_numbers = #tpu.dot_dimension_numbers<[1], [0], [0], [1], [0, 0, 1, 1], [], []>} : vector<64x128xbf16>, vector<128x256xbf16>, vector<64x256xf32> -> vector<64x256xf32>
    %61 = vector.extract_strided_slice %60 {offsets = [0, 0], sizes = [64, 128], strides = [1, 1]} : vector<64x256xf32> to vector<64x128xf32>
    %62 = arith.addf %54, %61 : vector<64x128xf32>
    %63 = vector.extract_strided_slice %60 {offsets = [0, 128], sizes = [64, 128], strides = [1, 1]} : vector<64x256xf32> to vector<64x128xf32>
    %c0_49 = arith.constant 0 : index
    %c0_50 = arith.constant 0 : index
    %64 = vector.load %arg7[%c0_49, %c0_50] : memref<2x128xf32, #tpu.memory_space<vmem>>, vector<1x128xf32>
    %65 = vector.broadcast %64 : vector<1x128xf32> to vector<64x128xf32>
    %66 = arith.mulf %63, %65 : vector<64x128xf32>
    %c1_51 = arith.constant 1 : index
    %c0_52 = arith.constant 0 : index
    %67 = vector.load %arg7[%c1_51, %c0_52] : memref<2x128xf32, #tpu.memory_space<vmem>>, vector<1x128xf32>
    %68 = vector.broadcast %67 : vector<1x128xf32> to vector<64x128xf32>
    %69 = arith.addf %66, %68 : vector<64x128xf32>
    %c0_53 = arith.constant 0 : index
    %c0_54 = arith.constant 0 : index
    %70 = vector.load %arg3[%c0_53, %c0_54] : memref<2x128xf32, #tpu.memory_space<vmem>>, vector<1x128xf32>
    %71 = vector.broadcast %70 : vector<1x128xf32> to vector<64x128xf32>
    %72 = arith.mulf %62, %71 : vector<64x128xf32>
    %c1_55 = arith.constant 1 : index
    %c0_56 = arith.constant 0 : index
    %73 = vector.load %arg3[%c1_55, %c0_56] : memref<2x128xf32, #tpu.memory_space<vmem>>, vector<1x128xf32>
    %74 = vector.broadcast %73 : vector<1x128xf32> to vector<64x128xf32>
    %75 = arith.addf %72, %74 : vector<64x128xf32>
    %cst_57 = arith.constant 0.000000e+00 : f32
    %76 = vector.broadcast %cst_57 : f32 to vector<64x128xf32>
    %77 = arith.maximumf %75, %76 : vector<64x128xf32>
    %cst_58 = arith.constant 0.000000e+00 : f32
    %78 = vector.broadcast %cst_58 : f32 to vector<1x16x128xf32>
    %c0_59 = arith.constant 0 : index
    %c0_60 = arith.constant 0 : index
    %c0_61 = arith.constant 0 : index
    %79 = vector.load %arg9[%c0_59, %c0_60, %c0_61] : memref<10x16x128xf32, #tpu.memory_space<vmem>>, vector<1x16x128xf32>
    tpu.vector_store %arg9[%c0_59, %c0_60, %c0_61], %78 {strides = array<i32>} : memref<10x16x128xf32, #tpu.memory_space<vmem>>, vector<1x16x128xf32>,
    %cst_62 = arith.constant 0.000000e+00 : f32
    %80 = vector.broadcast %cst_62 : f32 to vector<1x16x128xf32>
    %c9_63 = arith.constant 9 : index
    %c0_64 = arith.constant 0 : index
    %c0_65 = arith.constant 0 : index
    %81 = vector.load %arg9[%c9_63, %c0_64, %c0_65] : memref<10x16x128xf32, #tpu.memory_space<vmem>>, vector<1x16x128xf32>
    tpu.vector_store %arg9[%c9_63, %c0_64, %c0_65], %80 {strides = array<i32>} : memref<10x16x128xf32, #tpu.memory_space<vmem>>, vector<1x16x128xf32>,
    %cst_66 = arith.constant 0.000000e+00 : f32
    %82 = vector.broadcast %cst_66 : f32 to vector<10x1x128xf32>
    %c0_67 = arith.constant 0 : index
    %c0_68 = arith.constant 0 : index
    %c0_69 = arith.constant 0 : index
    %83 = vector.load %arg9[%c0_67, %c0_68, %c0_69] : memref<10x16x128xf32, #tpu.memory_space<vmem>>, vector<10x1x128xf32>
    tpu.vector_store %arg9[%c0_67, %c0_68, %c0_69], %82 {strides = array<i32>} : memref<10x16x128xf32, #tpu.memory_space<vmem>>, vector<10x1x128xf32>,
    %cst_70 = arith.constant 0.000000e+00 : f32
    %84 = vector.broadcast %cst_70 : f32 to vector<10x1x128xf32>
    %c0_71 = arith.constant 0 : index
    %c9_72 = arith.constant 9 : index
    %c0_73 = arith.constant 0 : index
    %85 = vector.load %arg9[%c0_71, %c9_72, %c0_73] : memref<10x16x128xf32, #tpu.memory_space<vmem>>, vector<10x1x128xf32>
    tpu.vector_store %arg9[%c0_71, %c9_72, %c0_73], %84 {strides = array<i32>} : memref<10x16x128xf32, #tpu.memory_space<vmem>>, vector<10x1x128xf32>,
    %86 = vector.shape_cast %77 : vector<64x128xf32> to vector<8x8x128xf32>
    %c1_74 = arith.constant 1 : index
    %c1_75 = arith.constant 1 : index
    %c0_76 = arith.constant 0 : index
    %87 = vector.load %arg9[%c1_74, %c1_75, %c0_76] : memref<10x16x128xf32, #tpu.memory_space<vmem>>, vector<8x8x128xf32>
    tpu.vector_store %arg9[%c1_74, %c1_75, %c0_76], %86 {strides = array<i32>} : memref<10x16x128xf32, #tpu.memory_space<vmem>>, vector<8x8x128xf32>,
    %c0_77 = arith.constant 0 : index
    %c0_78 = arith.constant 0 : index
    %c0_79 = arith.constant 0 : index
    %88 = vector.load %arg9[%c0_77, %c0_78, %c0_79] : memref<10x16x128xf32, #tpu.memory_space<vmem>>, vector<8x8x128xf32>
    %89 = vector.shape_cast %88 : vector<8x8x128xf32> to vector<64x128xf32>
    %90 = arith.truncf %89 : vector<64x128xf32> to vector<64x128xbf16>
    %c0_80 = arith.constant 0 : index
    %c0_81 = arith.constant 0 : index
    %91 = vector.load %arg4[%c0_80, %c0_81] : memref<1152x128xbf16, #tpu.memory_space<vmem>>, vector<128x128xbf16>
    %cst_82 = arith.constant dense<0.000000e+00> : vector<64x128xf32>
    %92 = tpu.matmul %90, %91, %cst_82 {dimension_numbers = #tpu.dot_dimension_numbers<[1], [0], [0], [1], [0, 0, 1, 1], [], []>} : vector<64x128xbf16>, vector<128x128xbf16>, vector<64x128xf32> -> vector<64x128xf32>
    %c0_83 = arith.constant 0 : index
    %c1_84 = arith.constant 1 : index
    %c0_85 = arith.constant 0 : index
    %93 = vector.load %arg9[%c0_83, %c1_84, %c0_85] : memref<10x16x128xf32, #tpu.memory_space<vmem>>, vector<8x8x128xf32>
    %94 = vector.shape_cast %93 : vector<8x8x128xf32> to vector<64x128xf32>
    %95 = arith.truncf %94 : vector<64x128xf32> to vector<64x128xbf16>
    %c128_86 = arith.constant 128 : index
    %c0_87 = arith.constant 0 : index
    %96 = vector.load %arg4[%c128_86, %c0_87] : memref<1152x128xbf16, #tpu.memory_space<vmem>>, vector<128x128xbf16>
    %cst_88 = arith.constant dense<0.000000e+00> : vector<64x128xf32>
    %97 = tpu.matmul %95, %96, %cst_88 {dimension_numbers = #tpu.dot_dimension_numbers<[1], [0], [0], [1], [0, 0, 1, 1], [], []>} : vector<64x128xbf16>, vector<128x128xbf16>, vector<64x128xf32> -> vector<64x128xf32>
    %98 = arith.addf %92, %97 : vector<64x128xf32>
    %c0_89 = arith.constant 0 : index
    %c2 = arith.constant 2 : index
    %c0_90 = arith.constant 0 : index
    %99 = vector.load %arg9[%c0_89, %c2, %c0_90] : memref<10x16x128xf32, #tpu.memory_space<vmem>>, vector<8x8x128xf32>
    %100 = vector.shape_cast %99 : vector<8x8x128xf32> to vector<64x128xf32>
    %101 = arith.truncf %100 : vector<64x128xf32> to vector<64x128xbf16>
    %c256_91 = arith.constant 256 : index
    %c0_92 = arith.constant 0 : index
    %102 = vector.load %arg4[%c256_91, %c0_92] : memref<1152x128xbf16, #tpu.memory_space<vmem>>, vector<128x128xbf16>
    %cst_93 = arith.constant dense<0.000000e+00> : vector<64x128xf32>
    %103 = tpu.matmul %101, %102, %cst_93 {dimension_numbers = #tpu.dot_dimension_numbers<[1], [0], [0], [1], [0, 0, 1, 1], [], []>} : vector<64x128xbf16>, vector<128x128xbf16>, vector<64x128xf32> -> vector<64x128xf32>
    %104 = arith.addf %98, %103 : vector<64x128xf32>
    %c1_94 = arith.constant 1 : index
    %c0_95 = arith.constant 0 : index
    %c0_96 = arith.constant 0 : index
    %105 = vector.load %arg9[%c1_94, %c0_95, %c0_96] : memref<10x16x128xf32, #tpu.memory_space<vmem>>, vector<8x8x128xf32>
    %106 = vector.shape_cast %105 : vector<8x8x128xf32> to vector<64x128xf32>
    %107 = arith.truncf %106 : vector<64x128xf32> to vector<64x128xbf16>
    %c384_97 = arith.constant 384 : index
    %c0_98 = arith.constant 0 : index
    %108 = vector.load %arg4[%c384_97, %c0_98] : memref<1152x128xbf16, #tpu.memory_space<vmem>>, vector<128x128xbf16>
    %cst_99 = arith.constant dense<0.000000e+00> : vector<64x128xf32>
    %109 = tpu.matmul %107, %108, %cst_99 {dimension_numbers = #tpu.dot_dimension_numbers<[1], [0], [0], [1], [0, 0, 1, 1], [], []>} : vector<64x128xbf16>, vector<128x128xbf16>, vector<64x128xf32> -> vector<64x128xf32>
    %110 = arith.addf %104, %109 : vector<64x128xf32>
    %c1_100 = arith.constant 1 : index
    %c1_101 = arith.constant 1 : index
    %c0_102 = arith.constant 0 : index
    %111 = vector.load %arg9[%c1_100, %c1_101, %c0_102] : memref<10x16x128xf32, #tpu.memory_space<vmem>>, vector<8x8x128xf32>
    %112 = vector.shape_cast %111 : vector<8x8x128xf32> to vector<64x128xf32>
    %113 = arith.truncf %112 : vector<64x128xf32> to vector<64x128xbf16>
    %c512 = arith.constant 512 : index
    %c0_103 = arith.constant 0 : index
    %114 = vector.load %arg4[%c512, %c0_103] : memref<1152x128xbf16, #tpu.memory_space<vmem>>, vector<128x128xbf16>
    %cst_104 = arith.constant dense<0.000000e+00> : vector<64x128xf32>
    %115 = tpu.matmul %113, %114, %cst_104 {dimension_numbers = #tpu.dot_dimension_numbers<[1], [0], [0], [1], [0, 0, 1, 1], [], []>} : vector<64x128xbf16>, vector<128x128xbf16>, vector<64x128xf32> -> vector<64x128xf32>
    %116 = arith.addf %110, %115 : vector<64x128xf32>
    %c1_105 = arith.constant 1 : index
    %c2_106 = arith.constant 2 : index
    %c0_107 = arith.constant 0 : index
    %117 = vector.load %arg9[%c1_105, %c2_106, %c0_107] : memref<10x16x128xf32, #tpu.memory_space<vmem>>, vector<8x8x128xf32>
    %118 = vector.shape_cast %117 : vector<8x8x128xf32> to vector<64x128xf32>
    %119 = arith.truncf %118 : vector<64x128xf32> to vector<64x128xbf16>
    %c640_108 = arith.constant 640 : index
    %c0_109 = arith.constant 0 : index
    %120 = vector.load %arg4[%c640_108, %c0_109] : memref<1152x128xbf16, #tpu.memory_space<vmem>>, vector<128x128xbf16>
    %cst_110 = arith.constant dense<0.000000e+00> : vector<64x128xf32>
    %121 = tpu.matmul %119, %120, %cst_110 {dimension_numbers = #tpu.dot_dimension_numbers<[1], [0], [0], [1], [0, 0, 1, 1], [], []>} : vector<64x128xbf16>, vector<128x128xbf16>, vector<64x128xf32> -> vector<64x128xf32>
    %122 = arith.addf %116, %121 : vector<64x128xf32>
    %c2_111 = arith.constant 2 : index
    %c0_112 = arith.constant 0 : index
    %c0_113 = arith.constant 0 : index
    %123 = vector.load %arg9[%c2_111, %c0_112, %c0_113] : memref<10x16x128xf32, #tpu.memory_space<vmem>>, vector<8x8x128xf32>
    %124 = vector.shape_cast %123 : vector<8x8x128xf32> to vector<64x128xf32>
    %125 = arith.truncf %124 : vector<64x128xf32> to vector<64x128xbf16>
    %c768_114 = arith.constant 768 : index
    %c0_115 = arith.constant 0 : index
    %126 = vector.load %arg4[%c768_114, %c0_115] : memref<1152x128xbf16, #tpu.memory_space<vmem>>, vector<128x128xbf16>
    %cst_116 = arith.constant dense<0.000000e+00> : vector<64x128xf32>
    %127 = tpu.matmul %125, %126, %cst_116 {dimension_numbers = #tpu.dot_dimension_numbers<[1], [0], [0], [1], [0, 0, 1, 1], [], []>} : vector<64x128xbf16>, vector<128x128xbf16>, vector<64x128xf32> -> vector<64x128xf32>
    %128 = arith.addf %122, %127 : vector<64x128xf32>
    %c2_117 = arith.constant 2 : index
    %c1_118 = arith.constant 1 : index
    %c0_119 = arith.constant 0 : index
    %129 = vector.load %arg9[%c2_117, %c1_118, %c0_119] : memref<10x16x128xf32, #tpu.memory_space<vmem>>, vector<8x8x128xf32>
    %130 = vector.shape_cast %129 : vector<8x8x128xf32> to vector<64x128xf32>
    %131 = arith.truncf %130 : vector<64x128xf32> to vector<64x128xbf16>
    %c896_120 = arith.constant 896 : index
    %c0_121 = arith.constant 0 : index
    %132 = vector.load %arg4[%c896_120, %c0_121] : memref<1152x128xbf16, #tpu.memory_space<vmem>>, vector<128x128xbf16>
    %cst_122 = arith.constant dense<0.000000e+00> : vector<64x128xf32>
    %133 = tpu.matmul %131, %132, %cst_122 {dimension_numbers = #tpu.dot_dimension_numbers<[1], [0], [0], [1], [0, 0, 1, 1], [], []>} : vector<64x128xbf16>, vector<128x128xbf16>, vector<64x128xf32> -> vector<64x128xf32>
    %134 = arith.addf %128, %133 : vector<64x128xf32>
    %c2_123 = arith.constant 2 : index
    %c2_124 = arith.constant 2 : index
    %c0_125 = arith.constant 0 : index
    %135 = vector.load %arg9[%c2_123, %c2_124, %c0_125] : memref<10x16x128xf32, #tpu.memory_space<vmem>>, vector<8x8x128xf32>
    %136 = vector.shape_cast %135 : vector<8x8x128xf32> to vector<64x128xf32>
    %137 = arith.truncf %136 : vector<64x128xf32> to vector<64x128xbf16>
    %c1024_126 = arith.constant 1024 : index
    %c0_127 = arith.constant 0 : index
    %138 = vector.load %arg4[%c1024_126, %c0_127] : memref<1152x128xbf16, #tpu.memory_space<vmem>>, vector<128x128xbf16>
    %cst_128 = arith.constant dense<0.000000e+00> : vector<64x128xf32>
    %139 = tpu.matmul %137, %138, %cst_128 {dimension_numbers = #tpu.dot_dimension_numbers<[1], [0], [0], [1], [0, 0, 1, 1], [], []>} : vector<64x128xbf16>, vector<128x128xbf16>, vector<64x128xf32> -> vector<64x128xf32>
    %140 = arith.addf %134, %139 : vector<64x128xf32>
    %c0_129 = arith.constant 0 : index
    %c0_130 = arith.constant 0 : index
    %141 = vector.load %arg5[%c0_129, %c0_130] : memref<2x128xf32, #tpu.memory_space<vmem>>, vector<1x128xf32>
    %142 = vector.broadcast %141 : vector<1x128xf32> to vector<64x128xf32>
    %143 = arith.mulf %140, %142 : vector<64x128xf32>
    %c1_131 = arith.constant 1 : index
    %c0_132 = arith.constant 0 : index
    %144 = vector.load %arg5[%c1_131, %c0_132] : memref<2x128xf32, #tpu.memory_space<vmem>>, vector<1x128xf32>
    %145 = vector.broadcast %144 : vector<1x128xf32> to vector<64x128xf32>
    %146 = arith.addf %143, %145 : vector<64x128xf32>
    %147 = arith.addf %146, %69 : vector<64x128xf32>
    %cst_133 = arith.constant 0.000000e+00 : f32
    %148 = vector.broadcast %cst_133 : f32 to vector<64x128xf32>
    %149 = arith.maximumf %147, %148 : vector<64x128xf32>
    %150 = vector.shape_cast %149 : vector<64x128xf32> to vector<8x8x128xf32>
    %c0_134 = arith.constant 0 : index
    %c0_135 = arith.constant 0 : index
    %c0_136 = arith.constant 0 : index
    %c0_137 = arith.constant 0 : index
    %151 = vector.load %arg8[%c0_134, %c0_135, %c0_136, %c0_137] : memref<1x8x8x128xf32, #tpu.memory_space<vmem>>, vector<1x8x8x128xf32>
    %152 = vector.shape_cast %151 : vector<1x8x8x128xf32> to vector<8x8x128xf32>
    %153 = vector.shape_cast %150 : vector<8x8x128xf32> to vector<1x8x8x128xf32>
    tpu.vector_store %arg8[%c0_134, %c0_135, %c0_136, %c0_137], %153 {strides = array<i32>} : memref<1x8x8x128xf32, #tpu.memory_space<vmem>>, vector<1x8x8x128xf32>,
    return
  }
  func.func @transform_0(%arg0: i32) -> (i32, i32, i32, i32) {
    %c0_i32 = arith.constant 0 : i32
    %c0_i32_0 = arith.constant 0 : i32
    %c0_i32_1 = arith.constant 0 : i32
    %c0_i32_2 = arith.constant 0 : i32
    return %arg0, %c0_i32, %c0_i32_0, %c0_i32_1 : i32, i32, i32, i32
  }
  func.func @transform_1(%arg0: i32) -> (i32, i32) {
    %c0_i32 = arith.constant 0 : i32
    %c0_i32_0 = arith.constant 0 : i32
    %c0_i32_1 = arith.constant 0 : i32
    return %c0_i32, %c0_i32_0 : i32, i32
  }
  func.func @transform_2(%arg0: i32) -> (i32, i32) {
    %c0_i32 = arith.constant 0 : i32
    %c0_i32_0 = arith.constant 0 : i32
    %c0_i32_1 = arith.constant 0 : i32
    return %c0_i32, %c0_i32_0 : i32, i32
  }
  func.func @transform_3(%arg0: i32) -> (i32, i32) {
    %c0_i32 = arith.constant 0 : i32
    %c0_i32_0 = arith.constant 0 : i32
    %c0_i32_1 = arith.constant 0 : i32
    return %c0_i32, %c0_i32_0 : i32, i32
  }
  func.func @transform_4(%arg0: i32) -> (i32, i32) {
    %c0_i32 = arith.constant 0 : i32
    %c0_i32_0 = arith.constant 0 : i32
    %c0_i32_1 = arith.constant 0 : i32
    return %c0_i32, %c0_i32_0 : i32, i32
  }
  func.func @transform_5(%arg0: i32) -> (i32, i32) {
    %c0_i32 = arith.constant 0 : i32
    %c0_i32_0 = arith.constant 0 : i32
    %c0_i32_1 = arith.constant 0 : i32
    return %c0_i32, %c0_i32_0 : i32, i32
  }
  func.func @transform_6(%arg0: i32) -> (i32, i32) {
    %c0_i32 = arith.constant 0 : i32
    %c0_i32_0 = arith.constant 0 : i32
    %c0_i32_1 = arith.constant 0 : i32
    return %c0_i32, %c0_i32_0 : i32, i32
  }
  func.func @transform_7(%arg0: i32) -> (i32, i32, i32, i32) {
    %c0_i32 = arith.constant 0 : i32
    %c0_i32_0 = arith.constant 0 : i32
    %c0_i32_1 = arith.constant 0 : i32
    %c0_i32_2 = arith.constant 0 : i32
    return %arg0, %c0_i32, %c0_i32_0, %c0_i32_1 : i32, i32, i32, i32
  }
}

</mosaic_0001>

<llo_original>
// kernel: tpu_custom_call.1
$region0: #{tpu_custom_call.1}
  #allocation0 [shape = 'u32[]', space=smem, size = 0x4, offset = 0x4, fixed_abs, tag = 'smem constant byte address 0x4 - core index']
  #allocation1 [shape = 'u32[72,128]{1,0:T(1,128)}', space=vmem, size = 0x9000, scoped, tag = 'internal scratch']
  #allocation2 [shape = 'f32[10,16,128]{2,1,0:T(8,128)}', space=vmem, size = 0x14000, scoped, tag = 'scratch operand']
  %s0 = inlined_call_operand.hbm [shape: f32[2,36,16,128], index: 0, kind: input, shape index: {}]
  %s1 = inlined_call_operand.hbm [shape: bf16[1152,128], index: 1, kind: input, shape index: {}]
  %s2 = inlined_call_operand.hbm [shape: f32[2,128], index: 2, kind: input, shape index: {}]
  %s3 = inlined_call_operand.hbm [shape: bf16[1152,128], index: 3, kind: input, shape index: {}]
  %s4 = inlined_call_operand.vmem [shape: f32[2,128], index: 4, kind: input, shape index: {}]
  %s5 = inlined_call_operand.hbm [shape: bf16[128,256], index: 5, kind: input, shape index: {}]
  %s6 = inlined_call_operand.vmem [shape: f32[2,128], index: 6, kind: input, shape index: {}]
  %s7 = inlined_call_operand.hbm [shape: f32[2,8,8,128], index: 7, kind: output, shape index: {}]
  %s8 = sld [smem:[#allocation0]]
  $region81: #{tpu_custom_call.1} parent=0
    _
  %s10 = ssub.s32 1, %s8
  %s11 = scalar_select 0, %s10, %s8
  $region1: #{tpu_custom_call.1} parent=0
    #allocation3 [shape = 'u8[589824]{0}', space=vmem, size = 0x90000, scoped, tag = 'input window, operand 0']
    #allocation4 [shape = 's32[2]{0}', space=sflag, size = 0x8, scoped, tag = 'scoped memory for tpu_custom_call.1']
    #allocation5 [shape = 's32[2]{0}', space=sflag, size = 0x8, scoped, tag = 'scoped memory for tpu_custom_call.1']
    #allocation6 [shape = 'u8[294912]{0}', space=vmem, size = 0x48000, scoped, tag = 'input window, operand 1, single buffered']
    #allocation7 [shape = 's32[1]{0}', space=sflag, size = 0x4, scoped, tag = 'scoped memory for tpu_custom_call.1']
    #allocation8 [shape = 'u8[1024]{0}', space=vmem, size = 0x400, scoped, tag = 'input window, operand 2, single buffered']
    #allocation9 [shape = 'u8[294912]{0}', space=vmem, size = 0x48000, scoped, tag = 'input window, operand 3, single buffered']
    #allocation10 [shape = 's32[1]{0}', space=sflag, size = 0x4, scoped, tag = 'scoped memory for tpu_custom_call.1']
    #allocation11 [shape = 'u8[65536]{0}', space=vmem, size = 0x10000, scoped, tag = 'input window, operand 5, single buffered']
    #allocation12 [shape = 'u8[65536]{0}', space=vmem, size = 0x10000, scoped, tag = 'output window, operand 0']
    %12 = vsyncpa [#allocation4], 0
    %s13 = scalar_lea.sflag [#allocation4], 1
    %14 = vsyncpa %s13, 0
    %15 = vsyncpa [#allocation7], 0
    %16 = vsyncpa [#allocation10], 0
    %17 = vsyncpa [#allocation5], 0
    %s18 = scalar_lea.sflag [#allocation5], 1
    %19 = vsyncpa %s18, 0
    loop: start=0, step=1, limit=4
    $region2: #{tpu_custom_call.1} parent=1 // loop_pre_header
      _
    $region3: #{tpu_custom_call.1} parent=1 // loop_header
      %s21 = sphi 0, %s25
      %p22 = scmp.ge.s32.totalorder %s21, 4
      %s31 = sphi 0, %s33
      %s34 = sphi 0, %s31
      %s35 = sphi 0, %s34
      %s51 = sphi 0, %s35
      %s55 = sphi 0, %s55
      %s57 = sphi 0, %s55
      %s58 = sphi 0, %s57
      %s72 = sphi 0, %s58
      %s76 = sphi 0, %s76
      %s78 = sphi 0, %s76
      %s79 = sphi 0, %s78
      %s93 = sphi 0, %s79
      %s97 = sphi 0, %s97
      %s99 = sphi 0, %s97
      %s100 = sphi 0, %s99
      %s114 = sphi 0, %s100
      %s118 = sphi 0, %s118
      %s120 = sphi 0, %s118
      %s121 = sphi 0, %s120
      %s135 = sphi 0, %s121
      %s139 = sphi 0, %s139
      %s141 = sphi 0, %s139
      %s142 = sphi 0, %s141
      %s156 = sphi 0, %s142
      %s160 = sphi 0, %s160
      %s162 = sphi 0, %s160
      %s163 = sphi 0, %s162
      %s177 = sphi 0, %s163
      %s183 = sphi 0, %s185
      %s186 = sphi 0, %s183
      %s187 = sphi 0, %s186
      %s203 = sphi 0, %s187
    $region4: #{tpu_custom_call.1} parent=1 // loop_header_branch
      %24 = sbr.rel (%p22) target = $region8
    $region5: #{tpu_custom_call.1} parent=1 // loop_body
      %s26 = ssub.s32 %s21, 1
      %s27 = ssub.s32 %s21, 2
      %s28 = sadd.s32 %s21, 1
      %s29 = ssub.s32 %s21, %s28
      %p30 = scmp.eq.s32.totalorder %s29, 0
      %s32 = sadd.s32 %s31, 1
      %s33 = scalar_select %p30, %s31, %s32
      %p36 = pneg %p30
      %p37 = scmp.eq.s32.totalorder %s21, 1
      %p38 = por %p36, %p37
      %p39 = scmp.ne.s32.totalorder %s31, %s34
      %p40 = scmp.eq.s32.totalorder %s21, 0
      %p41 = por %p39, %p40
      %p42 = scmp.ne.s32.totalorder %s31, %s34
      %p43 = scmp.eq.s32.totalorder %s26, 1
      %p44 = por %p42, %p43
      %p45 = scmp.ne.s32.totalorder %s34, %s35
      %p46 = scmp.eq.s32.totalorder %s26, 0
      %p47 = por %p45, %p46
      %p48 = scmp.ne.s32.totalorder %s34, %s35
      %p49 = scmp.eq.s32.totalorder %s27, 1
      %p50 = por %p48, %p49
      %p52 = scmp.ne.s32.totalorder %s35, %s51
      %p53 = scmp.eq.s32.totalorder %s27, 0
      %p54 = por %p52, %p53
      %s56 = sadd.s32 %s55, 1
      %p59 = scmp.eq.s32.totalorder %s21, 1
      %p60 = scmp.ne.s32.totalorder %s55, %s57
      %p61 = scmp.eq.s32.totalorder %s21, 0
      %p62 = por %p60, %p61
      %p63 = scmp.ne.s32.totalorder %s55, %s57
      %p64 = scmp.eq.s32.totalorder %s26, 1
      %p65 = por %p63, %p64
      %p66 = scmp.ne.s32.totalorder %s57, %s58
      %p67 = scmp.eq.s32.totalorder %s26, 0
      %p68 = por %p66, %p67
      %p69 = scmp.ne.s32.totalorder %s57, %s58
      %p70 = scmp.eq.s32.totalorder %s27, 1
      %p71 = por %p69, %p70
      %p73 = scmp.ne.s32.totalorder %s58, %s72
      %p74 = scmp.eq.s32.totalorder %s27, 0
      %p75 = por %p73, %p74
      %s77 = sadd.s32 %s76, 1
      %p80 = scmp.eq.s32.totalorder %s21, 1
      %p81 = scmp.ne.s32.totalorder %s76, %s78
      %p82 = scmp.eq.s32.totalorder %s21, 0
      %p83 = por %p81, %p82
      %p84 = scmp.ne.s32.totalorder %s76, %s78
      %p85 = scmp.eq.s32.totalorder %s26, 1
      %p86 = por %p84, %p85
      %p87 = scmp.ne.s32.totalorder %s78, %s79
      %p88 = scmp.eq.s32.totalorder %s26, 0
      %p89 = por %p87, %p88
      %p90 = scmp.ne.s32.totalorder %s78, %s79
      %p91 = scmp.eq.s32.totalorder %s27, 1
      %p92 = por %p90, %p91
      %p94 = scmp.ne.s32.totalorder %s79, %s93
      %p95 = scmp.eq.s32.totalorder %s27, 0
      %p96 = por %p94, %p95
      %s98 = sadd.s32 %s97, 1
      %p101 = scmp.eq.s32.totalorder %s21, 1
      %p102 = scmp.ne.s32.totalorder %s97, %s99
      %p103 = scmp.eq.s32.totalorder %s21, 0
      %p104 = por %p102, %p103
      %p105 = scmp.ne.s32.totalorder %s97, %s99
      %p106 = scmp.eq.s32.totalorder %s26, 1
      %p107 = por %p105, %p106
      %p108 = scmp.ne.s32.totalorder %s99, %s100
      %p109 = scmp.eq.s32.totalorder %s26, 0
      %p110 = por %p108, %p109
      %p111 = scmp.ne.s32.totalorder %s99, %s100
      %p112 = scmp.eq.s32.totalorder %s27, 1
      %p113 = por %p111, %p112
      %p115 = scmp.ne.s32.totalorder %s100, %s114
      %p116 = scmp.eq.s32.totalorder %s27, 0
      %p117 = por %p115, %p116
      %s119 = sadd.s32 %s118, 1
      %p122 = scmp.eq.s32.totalorder %s21, 1
      %p123 = scmp.ne.s32.totalorder %s118, %s120
      %p124 = scmp.eq.s32.totalorder %s21, 0
      %p125 = por %p123, %p124
      %p126 = scmp.ne.s32.totalorder %s118, %s120
      %p127 = scmp.eq.s32.totalorder %s26, 1
      %p128 = por %p126, %p127
      %p129 = scmp.ne.s32.totalorder %s120, %s121
      %p130 = scmp.eq.s32.totalorder %s26, 0
      %p131 = por %p129, %p130
      %p132 = scmp.ne.s32.totalorder %s120, %s121
      %p133 = scmp.eq.s32.totalorder %s27, 1
      %p134 = por %p132, %p133
      %p136 = scmp.ne.s32.totalorder %s121, %s135
      %p137 = scmp.eq.s32.totalorder %s27, 0
      %p138 = por %p136, %p137
      %s140 = sadd.s32 %s139, 1
      %p143 = scmp.eq.s32.totalorder %s21, 1
      %p144 = scmp.ne.s32.totalorder %s139, %s141
      %p145 = scmp.eq.s32.totalorder %s21, 0
      %p146 = por %p144, %p145
      %p147 = scmp.ne.s32.totalorder %s139, %s141
      %p148 = scmp.eq.s32.totalorder %s26, 1
      %p149 = por %p147, %p148
      %p150 = scmp.ne.s32.totalorder %s141, %s142
      %p151 = scmp.eq.s32.totalorder %s26, 0
      %p152 = por %p150, %p151
      %p153 = scmp.ne.s32.totalorder %s141, %s142
      %p154 = scmp.eq.s32.totalorder %s27, 1
      %p155 = por %p153, %p154
      %p157 = scmp.ne.s32.totalorder %s142, %s156
      %p158 = scmp.eq.s32.totalorder %s27, 0
      %p159 = por %p157, %p158
      %s161 = sadd.s32 %s160, 1
      %p164 = scmp.eq.s32.totalorder %s21, 1
      %p165 = scmp.ne.s32.totalorder %s160, %s162
      %p166 = scmp.eq.s32.totalorder %s21, 0
      %p167 = por %p165, %p166
      %p168 = scmp.ne.s32.totalorder %s160, %s162
      %p169 = scmp.eq.s32.totalorder %s26, 1
      %p170 = por %p168, %p169
      %p171 = scmp.ne.s32.totalorder %s162, %s163
      %p172 = scmp.eq.s32.totalorder %s26, 0
      %p173 = por %p171, %p172
      %p174 = scmp.ne.s32.totalorder %s162, %s163
      %p175 = scmp.eq.s32.totalorder %s27, 1
      %p176 = por %p174, %p175
      %p178 = scmp.ne.s32.totalorder %s163, %s177
      %p179 = scmp.eq.s32.totalorder %s27, 0
      %p180 = por %p178, %p179
      %s181 = ssub.s32 %s21, %s28
      %p182 = scmp.eq.s32.totalorder %s181, 0
      %s184 = sadd.s32 %s183, 1
      %s185 = scalar_select %p182, %s183, %s184
      %p188 = pneg %p182
      %p189 = scmp.eq.s32.totalorder %s21, 1
      %p190 = por %p188, %p189
      %p191 = scmp.ne.s32.totalorder %s183, %s186
      %p192 = scmp.eq.s32.totalorder %s21, 0
      %p193 = por %p191, %p192
      %p194 = scmp.ne.s32.totalorder %s183, %s186
      %p195 = scmp.eq.s32.totalorder %s26, 1
      %p196 = por %p194, %p195
      %p197 = scmp.ne.s32.totalorder %s186, %s187
      %p198 = scmp.eq.s32.totalorder %s26, 0
      %p199 = por %p197, %p198
      %p200 = scmp.ne.s32.totalorder %s186, %s187
      %p201 = scmp.eq.s32.totalorder %s27, 1
      %p202 = por %p200, %p201
      %p204 = scmp.ne.s32.totalorder %s187, %s203
      %p205 = scmp.eq.s32.totalorder %s27, 0
      %p206 = por %p204, %p205
      %p207 = scmp.le.s32.totalorder 1, %s21
      %p208 = scmp.lt.s32.totalorder %s21, 3
      %p209 = pnand %p207, %p208
      %p210 = pneg %p209
      // Predicated region
      $region9: #{tpu_custom_call.1} parent=5 // pred_check
        _
      $region10: #{tpu_custom_call.1} parent=5 // pred_check_branch
        %212 = sbr.rel (%p209) target = $region12
      $region11: #{tpu_custom_call.1} parent=5 // pred_region
        %s213 = ssub.s32 %s21, 1
        // Predicated region
        $region13: #{tpu_custom_call.1} parent=11 // pred_check
          %p214 = pneg %p68
        $region14: #{tpu_custom_call.1} parent=11 // pred_check_branch
          %216 = sbr.rel (%p214) target = $region16
        $region15: #{tpu_custom_call.1} parent=11 // pred_region
          %218 = vsyncadd [#allocation7], 0
          %s219 = sshll.u32 %s1, 4
          %s220 = int_to_ptr.hbm [resolvable:$true] %s219
          %s221 = sshll.u32 [#allocation6], 4
          %s222 = int_to_ptr.vmem [resolvable:$true] %s221
          %227 = dma.hbm_to_vmem [thread:$0]  %s220, 9216, %s222, [#allocation7], 64, 64, 4
        $region16: #{tpu_custom_call.1} parent=11 // pred_fallthru
          _
        // Predicated region
        $region17: #{tpu_custom_call.1} parent=11 // pred_check
          %p228 = pneg %p89
        $region18: #{tpu_custom_call.1} parent=11 // pred_check_branch
          %230 = sbr.rel (%p228) target = $region20
        $region19: #{tpu_custom_call.1} parent=11 // pred_region
          %232 = vsyncadd [#allocation7], 0
          %s234 = sshll.u32 %s2, 4
          %s235 = int_to_ptr.hbm [resolvable:$true] %s234
          %s236 = sshll.u32 [#allocation8], 4
          %s237 = int_to_ptr.vmem [resolvable:$true] %s236
          %239 = dma.hbm_to_vmem [thread:$0]  %s235, 32, %s237, [#allocation7]
        $region20: #{tpu_custom_call.1} parent=11 // pred_fallthru
          _
        // Predicated region
        $region21: #{tpu_custom_call.1} parent=11 // pred_check
          %p240 = pneg %p110
        $region22: #{tpu_custom_call.1} parent=11 // pred_check_branch
          %242 = sbr.rel (%p240) target = $region24
        $region23: #{tpu_custom_call.1} parent=11 // pred_region
          %244 = vsyncadd [#allocation10], 0
          %s245 = sshll.u32 %s3, 4
          %s246 = int_to_ptr.hbm [resolvable:$true] %s245
          %s247 = sshll.u32 [#allocation9], 4
          %s248 = int_to_ptr.vmem [resolvable:$true] %s247
          %253 = dma.hbm_to_vmem [thread:$0]  %s246, 9216, %s248, [#allocation10], 64, 64, 4
        $region24: #{tpu_custom_call.1} parent=11 // pred_fallthru
          _
        // Predicated region
        $region25: #{tpu_custom_call.1} parent=11 // pred_check
          %p254 = pneg %p131
        $region26: #{tpu_custom_call.1} parent=11 // pred_check_branch
          %256 = sbr.rel (%p254) target = $region28
        $region27: #{tpu_custom_call.1} parent=11 // pred_region
          _
        $region28: #{tpu_custom_call.1} parent=11 // pred_fallthru
          _
        // Predicated region
        $region29: #{tpu_custom_call.1} parent=11 // pred_check
          %p257 = pneg %p152
        $region30: #{tpu_custom_call.1} parent=11 // pred_check_branch
          %259 = sbr.rel (%p257) target = $region32
        $region31: #{tpu_custom_call.1} parent=11 // pred_region
          %261 = vsyncadd [#allocation10], 0
          %s262 = sshll.u32 %s5, 4
          %s263 = int_to_ptr.hbm [resolvable:$true] %s262
          %s264 = sshll.u32 [#allocation11], 4
          %s265 = int_to_ptr.vmem [resolvable:$true] %s264
          %270 = dma.hbm_to_vmem [thread:$0]  %s263, 2048, %s265, [#allocation10], 128, 128, 8
        $region32: #{tpu_custom_call.1} parent=11 // pred_fallthru
          _
        // Predicated region
        $region33: #{tpu_custom_call.1} parent=11 // pred_check
          %p271 = pneg %p173
        $region34: #{tpu_custom_call.1} parent=11 // pred_check_branch
          %273 = sbr.rel (%p271) target = $region36
        $region35: #{tpu_custom_call.1} parent=11 // pred_region
          _
        $region36: #{tpu_custom_call.1} parent=11 // pred_fallthru
          _
      $region12: #{tpu_custom_call.1} parent=5 // pred_fallthru
        _
      %p274 = scmp.lt.s32.totalorder %s21, 2
      // Predicated region
      $region37: #{tpu_custom_call.1} parent=5 // pred_check
        %p275 = pneg %p274
      $region38: #{tpu_custom_call.1} parent=5 // pred_check_branch
        %277 = sbr.rel (%p275) target = $region40
      $region39: #{tpu_custom_call.1} parent=5 // pred_region
        // Predicated region
        $region41: #{tpu_custom_call.1} parent=39 // pred_check
          %p278 = pneg %p41
        $region42: #{tpu_custom_call.1} parent=39 // pred_check_branch
          %280 = sbr.rel (%p278) target = $region44
        $region43: #{tpu_custom_call.1} parent=39 // pred_region
          %s281 = sand.u32 %s31, 1
          %s282 = scalar_lea.sflag [#allocation4], %s281
          %s283 = sand.u32 %s31, 1
          %s284 = smul.addr %s283, 576
          %s285 = scalar_lea.vmem [#allocation3], %s284
          %287 = vsyncadd %s282, 0
          %s288 = smul.addr %s21, 72
          %s289 = smul.addr %s288, 8
          %s290 = scalar_lea.hbm %s0, %s289
          %s291 = sshll.u32 %s290, 4
          %s292 = int_to_ptr.hbm [resolvable:$true] %s291
          %s293 = sshll.u32 %s285, 4
          %s294 = int_to_ptr.vmem [resolvable:$true] %s293
          %299 = dma.hbm_to_vmem [thread:$0]  %s292, 9216, %s294, %s282, 128, 128, 8
        $region44: #{tpu_custom_call.1} parent=39 // pred_fallthru
          _
      $region40: #{tpu_custom_call.1} parent=5 // pred_fallthru
        _
      %p300 = scmp.le.s32.totalorder 1, %s21
      %p301 = scmp.lt.s32.totalorder %s21, 3
      %p302 = pnand %p300, %p301
      %p303 = pneg %p302
      // Predicated region
      $region45: #{tpu_custom_call.1} parent=5 // pred_check
        _
      $region46: #{tpu_custom_call.1} parent=5 // pred_check_branch
        %305 = sbr.rel (%p302) target = $region48
      $region47: #{tpu_custom_call.1} parent=5 // pred_region
        %s306 = ssub.s32 %s21, 1
        %s307 = sand.u32 %s34, 1
        %s308 = scalar_lea.sflag [#allocation4], %s307
        %s309 = sand.u32 %s34, 1
        %s310 = smul.addr %s309, 576
        %s311 = scalar_lea.vmem [#allocation3], %s310
        // Predicated region
        $region49: #{tpu_custom_call.1} parent=47 // pred_check
          %p312 = pneg %p47
        $region50: #{tpu_custom_call.1} parent=47 // pred_check_branch
          %314 = sbr.rel (%p312) target = $region52
        $region51: #{tpu_custom_call.1} parent=47 // pred_region
          %316 = dma.done %s308, 9216
        $region52: #{tpu_custom_call.1} parent=47 // pred_fallthru
          _
        // Predicated region
        $region53: #{tpu_custom_call.1} parent=47 // pred_check
          %p317 = pneg %p68
        $region54: #{tpu_custom_call.1} parent=47 // pred_check_branch
          %319 = sbr.rel (%p317) target = $region56
        $region55: #{tpu_custom_call.1} parent=47 // pred_region
          %321 = dma.done [#allocation7], 9216
        $region56: #{tpu_custom_call.1} parent=47 // pred_fallthru
          _
        // Predicated region
        $region57: #{tpu_custom_call.1} parent=47 // pred_check
          %p322 = pneg %p89
        $region58: #{tpu_custom_call.1} parent=47 // pred_check_branch
          %324 = sbr.rel (%p322) target = $region60
        $region59: #{tpu_custom_call.1} parent=47 // pred_region
          %326 = dma.done [#allocation7], 32
        $region60: #{tpu_custom_call.1} parent=47 // pred_fallthru
          _
        // Predicated region
        $region61: #{tpu_custom_call.1} parent=47 // pred_check
          %p327 = pneg %p110
        $region62: #{tpu_custom_call.1} parent=47 // pred_check_branch
          %329 = sbr.rel (%p327) target = $region64
        $region63: #{tpu_custom_call.1} parent=47 // pred_region
          %331 = dma.done [#allocation10], 9216
        $region64: #{tpu_custom_call.1} parent=47 // pred_fallthru
          _
        // Predicated region
        $region65: #{tpu_custom_call.1} parent=47 // pred_check
          %p332 = pneg %p152
        $region66: #{tpu_custom_call.1} parent=47 // pred_check_branch
          %334 = sbr.rel (%p332) target = $region68
        $region67: #{tpu_custom_call.1} parent=47 // pred_region
          %336 = dma.done [#allocation10], 2048
        $region68: #{tpu_custom_call.1} parent=47 // pred_fallthru
          _
        %s337 = sand.u32 %s34, 1
        %s338 = scalar_lea.sflag [#allocation4], %s337
        %s339 = sand.u32 %s34, 1
        %s340 = smul.addr %s339, 576
        %s341 = scalar_lea.vmem [#allocation3], %s340
        %p342 = pneg %p47
        %p343 = pneg %p44
        %p344 = pneg %p68
        %p345 = pneg %p65
        %p346 = pneg %p89
        %p347 = pneg %p86
        %p348 = pneg %p110
        %p349 = pneg %p107
        %p350 = pneg %p131
        %p351 = pneg %p128
        %p352 = pneg %p152
        %p353 = pneg %p149
        %p354 = pneg %p173
        %p355 = pneg %p170
        %p356 = pneg %p199
        %p357 = pneg %p196
        %s358 = sand.u32 %s186, 1
        %s359 = scalar_lea.sflag [#allocation5], %s358
        %s360 = sand.u32 %s186, 1
        %s361 = smul.addr %s360, 64
        %s362 = scalar_lea.vmem [#allocation12], %s361
        %v363 = vld [vmem:[%s311] sm:$0xff]
        %v364 = vld [vmem:[%s311 + $0x10] sm:$0xff]
        %v365 = vld [vmem:[%s311 + $0x20] sm:$0xff]
        %v366 = vld [vmem:[%s311 + $0x30] sm:$0xff]
        %v367 = vld [vmem:[%s311 + $0x40] sm:$0xff]
        %v368 = vld [vmem:[%s311 + $0x50] sm:$0xff]
        %v369 = vld [vmem:[%s311 + $0x60] sm:$0xff]
        %v370 = vld [vmem:[%s311 + $0x70] sm:$0xff]
        %v371 = vpack.c.bf16 %v364, %v363
        %v372 = vpack.c.bf16 %v366, %v365
        %v373 = vpack.c.bf16 %v368, %v367
        %v374 = vpack.c.bf16 %v370, %v369
        %v375 = vld [vmem:[#allocation6] sm:$0xf]
        %v376 = vld [vmem:[#allocation6 + $0x4] sm:$0xf]
        %v377 = vld [vmem:[#allocation6 + $0x8] sm:$0xf]
        %v378 = vld [vmem:[#allocation6 + $0xc] sm:$0xf]
        %v379 = vld [vmem:[#allocation6 + $0x10] sm:$0xf]
        %v380 = vld [vmem:[#allocation6 + $0x14] sm:$0xf]
        %v381 = vld [vmem:[#allocation6 + $0x18] sm:$0xf]
        %v382 = vld [vmem:[#allocation6 + $0x1c] sm:$0xf]
        %v383 = vld [vmem:[#allocation6 + $0x20] sm:$0xf]
        %v384 = vld [vmem:[#allocation6 + $0x24] sm:$0xf]
        %v385 = vld [vmem:[#allocation6 + $0x28] sm:$0xf]
        %v386 = vld [vmem:[#allocation6 + $0x2c] sm:$0xf]
        %v387 = vld [vmem:[#allocation6 + $0x30] sm:$0xf]
        %v388 = vld [vmem:[#allocation6 + $0x34] sm:$0xf]
        %v389 = vld [vmem:[#allocation6 + $0x38] sm:$0xf]
        %v390 = vld [vmem:[#allocation6 + $0x3c] sm:$0xf]
        %s391 = scalar_lea.vmem %s311, 144 [#allocation3]
        %v392 = vld [vmem:[%s391] sm:$0xff]
        %v393 = vld [vmem:[%s391 + $0x10] sm:$0xff]
        %v394 = vld [vmem:[%s391 + $0x20] sm:$0xff]
        %v395 = vld [vmem:[%s391 + $0x30] sm:$0xff]
        %v396 = vld [vmem:[%s391 + $0x40] sm:$0xff]
        %v397 = vld [vmem:[%s391 + $0x50] sm:$0xff]
        %v398 = vld [vmem:[%s391 + $0x60] sm:$0xff]
        %v399 = vld [vmem:[%s391 + $0x70] sm:$0xff]
        %v400 = vpack.c.bf16 %v393, %v392
        %v401 = vpack.c.bf16 %v395, %v394
        %v402 = vpack.c.bf16 %v397, %v396
        %v403 = vpack.c.bf16 %v399, %v398
        %v404 = vld [vmem:[#allocation6 + $0x40] sm:$0xf]
        %v405 = vld [vmem:[#allocation6 + $0x44] sm:$0xf]
        %v406 = vld [vmem:[#allocation6 + $0x48] sm:$0xf]
        %v407 = vld [vmem:[#allocation6 + $0x4c] sm:$0xf]
        %v408 = vld [vmem:[#allocation6 + $0x50] sm:$0xf]
        %v409 = vld [vmem:[#allocation6 + $0x54] sm:$0xf]
        %v410 = vld [vmem:[#allocation6 + $0x58] sm:$0xf]
        %v411 = vld [vmem:[#allocation6 + $0x5c] sm:$0xf]
        %v412 = vld [vmem:[#allocation6 + $0x60] sm:$0xf]
        %v413 = vld [vmem:[#allocation6 + $0x64] sm:$0xf]
        %v414 = vld [vmem:[#allocation6 + $0x68] sm:$0xf]
        %v415 = vld [vmem:[#allocation6 + $0x6c] sm:$0xf]
        %v416 = vld [vmem:[#allocation6 + $0x70] sm:$0xf]
        %v417 = vld [vmem:[#allocation6 + $0x74] sm:$0xf]
        %v418 = vld [vmem:[#allocation6 + $0x78] sm:$0xf]
        %v419 = vld [vmem:[#allocation6 + $0x7c] sm:$0xf]
        %v436 = vunpack.c.l.b16 %v404
        %v437 = vunpack.c.l.b16 %v405
        %v438 = vunpack.c.l.b16 %v406
        %v439 = vunpack.c.l.b16 %v407
        %v440 = vunpack.c.l.b16 %v408
        %v441 = vunpack.c.l.b16 %v409
        %v442 = vunpack.c.l.b16 %v410
        %v443 = vunpack.c.l.b16 %v411
        %v444 = vunpack.c.l.b16 %v412
        %v445 = vunpack.c.l.b16 %v413
        %v446 = vunpack.c.l.b16 %v414
        %v447 = vunpack.c.l.b16 %v415
        %v448 = vunpack.c.l.b16 %v416
        %v449 = vunpack.c.l.b16 %v417
        %v450 = vunpack.c.l.b16 %v418
        %v451 = vunpack.c.l.b16 %v419
        %v452 = vpack.c.b16 %v437, %v436
        %v453 = vpack.c.b16 %v439, %v438
        %v454 = vpack.c.b16 %v441, %v440
        %v455 = vpack.c.b16 %v443, %v442
        %v456 = vpack.c.b16 %v445, %v444
        %v457 = vpack.c.b16 %v447, %v446
        %v458 = vpack.c.b16 %v449, %v448
        %v459 = vpack.c.b16 %v451, %v450
        %468 = vmatpush.bf16.msra.mxu0 %v459
        %469 = vmatpush.bf16.msra.mxu0 %v458
        %470 = vmatpush.bf16.msra.mxu0 %v457
        %471 = vmatpush.bf16.msra.mxu0 %v456
        %472 = vmatpush.bf16.msra.mxu0 %v455
        %473 = vmatpush.bf16.msra.mxu0 %v454
        %474 = vmatpush.bf16.msra.mxu0 %v453
        %475 = vmatpush.bf16.msra.mxu0 %v452
        %476 = vmatmul.bf16.gmra.mxu0 %v400
        %v477 = vpop.f32.mrf.mxu0
        %v478 = vadd.f32 0.0, %v477
        %v479 = vpop.f32.mrf.mxu0
        %v480 = vadd.f32 0.0, %v479
        %481 = vmatmul.bf16.gmra.mxu0 %v401
        %v482 = vpop.f32.mrf.mxu0
        %v483 = vadd.f32 0.0, %v482
        %v484 = vpop.f32.mrf.mxu0
        %v485 = vadd.f32 0.0, %v484
        %486 = vmatmul.bf16.gmra.mxu0 %v402
        %v487 = vpop.f32.mrf.mxu0
        %v488 = vadd.f32 0.0, %v487
        %v489 = vpop.f32.mrf.mxu0
        %v490 = vadd.f32 0.0, %v489
        %491 = vmatmul.bf16.gmra.mxu0 %v403
        %v492 = vpop.f32.mrf.mxu0
        %v493 = vadd.f32 0.0, %v492
        %v494 = vpop.f32.mrf.mxu0
        %v495 = vadd.f32 0.0, %v494
        %496 = vdwg.mxu0
        %v513 = vunpack.c.l.b16 %v375
        %v514 = vunpack.c.l.b16 %v376
        %v515 = vunpack.c.l.b16 %v377
        %v516 = vunpack.c.l.b16 %v378
        %v517 = vunpack.c.l.b16 %v379
        %v518 = vunpack.c.l.b16 %v380
        %v519 = vunpack.c.l.b16 %v381
        %v520 = vunpack.c.l.b16 %v382
        %v521 = vunpack.c.l.b16 %v383
        %v522 = vunpack.c.l.b16 %v384
        %v523 = vunpack.c.l.b16 %v385
        %v524 = vunpack.c.l.b16 %v386
        %v525 = vunpack.c.l.b16 %v387
        %v526 = vunpack.c.l.b16 %v388
        %v527 = vunpack.c.l.b16 %v389
        %v528 = vunpack.c.l.b16 %v390
        %v529 = vpack.c.b16 %v514, %v513
        %v530 = vpack.c.b16 %v516, %v515
        %v531 = vpack.c.b16 %v518, %v517
        %v532 = vpack.c.b16 %v520, %v519
        %v533 = vpack.c.b16 %v522, %v521
        %v534 = vpack.c.b16 %v524, %v523
        %v535 = vpack.c.b16 %v526, %v525
        %v536 = vpack.c.b16 %v528, %v527
        %545 = vmatpush.bf16.msra.mxu0 %v536
        %546 = vmatpush.bf16.msra.mxu0 %v535
        %547 = vmatpush.bf16.msra.mxu0 %v534
        %548 = vmatpush.bf16.msra.mxu0 %v533
        %549 = vmatpush.bf16.msra.mxu0 %v532
        %550 = vmatpush.bf16.msra.mxu0 %v531
        %551 = vmatpush.bf16.msra.mxu0 %v530
        %552 = vmatpush.bf16.msra.mxu0 %v529
        %553 = vmatmul.bf16.gmra.mxu0 %v371
        %v554 = vpop.f32.mrf.mxu0
        %v555 = vadd.f32 %v478, %v554
        %v556 = vpop.f32.mrf.mxu0
        %v557 = vadd.f32 %v480, %v556
        %558 = vmatmul.bf16.gmra.mxu0 %v372
        %v559 = vpop.f32.mrf.mxu0
        %v560 = vadd.f32 %v483, %v559
        %v561 = vpop.f32.mrf.mxu0
        %v562 = vadd.f32 %v485, %v561
        %563 = vmatmul.bf16.gmra.mxu0 %v373
        %v564 = vpop.f32.mrf.mxu0
        %v565 = vadd.f32 %v488, %v564
        %v566 = vpop.f32.mrf.mxu0
        %v567 = vadd.f32 %v490, %v566
        %568 = vmatmul.bf16.gmra.mxu0 %v374
        %v569 = vpop.f32.mrf.mxu0
        %v570 = vadd.f32 %v493, %v569
        %v571 = vpop.f32.mrf.mxu0
        %v572 = vadd.f32 %v495, %v571
        %573 = vdwg.mxu0
        %v574 = vld [vmem:[%s311 + $0x1] sm:$0xff]
        %v575 = vld [vmem:[%s311 + $0x11] sm:$0xff]
        %v576 = vld [vmem:[%s311 + $0x21] sm:$0xff]
        %v577 = vld [vmem:[%s311 + $0x31] sm:$0xff]
        %v578 = vld [vmem:[%s311 + $0x41] sm:$0xff]
        %v579 = vld [vmem:[%s311 + $0x51] sm:$0xff]
        %v580 = vld [vmem:[%s311 + $0x61] sm:$0xff]
        %v581 = vld [vmem:[%s311 + $0x71] sm:$0xff]
        %v582 = vpack.c.bf16 %v575, %v574
        %v583 = vpack.c.bf16 %v577, %v576
        %v584 = vpack.c.bf16 %v579, %v578
        %v585 = vpack.c.bf16 %v581, %v580
        %v586 = vld [vmem:[#allocation6 + $0x80] sm:$0xf]
        %v587 = vld [vmem:[#allocation6 + $0x84] sm:$0xf]
        %v588 = vld [vmem:[#allocation6 + $0x88] sm:$0xf]
        %v589 = vld [vmem:[#allocation6 + $0x8c] sm:$0xf]
        %v590 = vld [vmem:[#allocation6 + $0x90] sm:$0xf]
        %v591 = vld [vmem:[#allocation6 + $0x94] sm:$0xf]
        %v592 = vld [vmem:[#allocation6 + $0x98] sm:$0xf]
        %v593 = vld [vmem:[#allocation6 + $0x9c] sm:$0xf]
        %v594 = vld [vmem:[#allocation6 + $0xa0] sm:$0xf]
        %v595 = vld [vmem:[#allocation6 + $0xa4] sm:$0xf]
        %v596 = vld [vmem:[#allocation6 + $0xa8] sm:$0xf]
        %v597 = vld [vmem:[#allocation6 + $0xac] sm:$0xf]
        %v598 = vld [vmem:[#allocation6 + $0xb0] sm:$0xf]
        %v599 = vld [vmem:[#allocation6 + $0xb4] sm:$0xf]
        %v600 = vld [vmem:[#allocation6 + $0xb8] sm:$0xf]
        %v601 = vld [vmem:[#allocation6 + $0xbc] sm:$0xf]
        %v618 = vunpack.c.l.b16 %v586
        %v619 = vunpack.c.l.b16 %v587
        %v620 = vunpack.c.l.b16 %v588
        %v621 = vunpack.c.l.b16 %v589
        %v622 = vunpack.c.l.b16 %v590
        %v623 = vunpack.c.l.b16 %v591
        %v624 = vunpack.c.l.b16 %v592
        %v625 = vunpack.c.l.b16 %v593
        %v626 = vunpack.c.l.b16 %v594
        %v627 = vunpack.c.l.b16 %v595
        %v628 = vunpack.c.l.b16 %v596
        %v629 = vunpack.c.l.b16 %v597
        %v630 = vunpack.c.l.b16 %v598
        %v631 = vunpack.c.l.b16 %v599
        %v632 = vunpack.c.l.b16 %v600
        %v633 = vunpack.c.l.b16 %v601
        %v634 = vpack.c.b16 %v619, %v618
        %v635 = vpack.c.b16 %v621, %v620
        %v636 = vpack.c.b16 %v623, %v622
        %v637 = vpack.c.b16 %v625, %v624
        %v638 = vpack.c.b16 %v627, %v626
        %v639 = vpack.c.b16 %v629, %v628
        %v640 = vpack.c.b16 %v631, %v630
        %v641 = vpack.c.b16 %v633, %v632
        %650 = vmatpush.bf16.msra.mxu0 %v641
        %651 = vmatpush.bf16.msra.mxu0 %v640
        %652 = vmatpush.bf16.msra.mxu0 %v639
        %653 = vmatpush.bf16.msra.mxu0 %v638
        %654 = vmatpush.bf16.msra.mxu0 %v637
        %655 = vmatpush.bf16.msra.mxu0 %v636
        %656 = vmatpush.bf16.msra.mxu0 %v635
        %657 = vmatpush.bf16.msra.mxu0 %v634
        %658 = vmatmul.bf16.gmra.mxu0 %v582
        %v659 = vpop.f32.mrf.mxu0
        %v660 = vadd.f32 0.0, %v659
        %v661 = vpop.f32.mrf.mxu0
        %v662 = vadd.f32 0.0, %v661
        %663 = vmatmul.bf16.gmra.mxu0 %v583
        %v664 = vpop.f32.mrf.mxu0
        %v665 = vadd.f32 0.0, %v664
        %v666 = vpop.f32.mrf.mxu0
        %v667 = vadd.f32 0.0, %v666
        %668 = vmatmul.bf16.gmra.mxu0 %v584
        %v669 = vpop.f32.mrf.mxu0
        %v670 = vadd.f32 0.0, %v669
        %v671 = vpop.f32.mrf.mxu0
        %v672 = vadd.f32 0.0, %v671
        %673 = vmatmul.bf16.gmra.mxu0 %v585
        %v674 = vpop.f32.mrf.mxu0
        %v675 = vadd.f32 0.0, %v674
        %v676 = vpop.f32.mrf.mxu0
        %v677 = vadd.f32 0.0, %v676
        %678 = vdwg.mxu0
        %v679 = vadd.f32 %v555, %v660
        %v680 = vadd.f32 %v557, %v662
        %v681 = vadd.f32 %v560, %v665
        %v682 = vadd.f32 %v562, %v667
        %v683 = vadd.f32 %v565, %v670
        %v684 = vadd.f32 %v567, %v672
        %v685 = vadd.f32 %v570, %v675
        %v686 = vadd.f32 %v572, %v677
        %s687 = scalar_lea.vmem %s311, 288 [#allocation3]
        %v688 = vld [vmem:[%s687] sm:$0xff]
        %v689 = vld [vmem:[%s687 + $0x10] sm:$0xff]
        %v690 = vld [vmem:[%s687 + $0x20] sm:$0xff]
        %v691 = vld [vmem:[%s687 + $0x30] sm:$0xff]
        %v692 = vld [vmem:[%s687 + $0x40] sm:$0xff]
        %v693 = vld [vmem:[%s687 + $0x50] sm:$0xff]
        %v694 = vld [vmem:[%s687 + $0x60] sm:$0xff]
        %v695 = vld [vmem:[%s687 + $0x70] sm:$0xff]
        %v696 = vpack.c.bf16 %v689, %v688
        %v697 = vpack.c.bf16 %v691, %v690
        %v698 = vpack.c.bf16 %v693, %v692
        %v699 = vpack.c.bf16 %v695, %v694
        %v700 = vld [vmem:[#allocation6 + $0xc0] sm:$0xf]
        %v701 = vld [vmem:[#allocation6 + $0xc4] sm:$0xf]
        %v702 = vld [vmem:[#allocation6 + $0xc8] sm:$0xf]
        %v703 = vld [vmem:[#allocation6 + $0xcc] sm:$0xf]
        %v704 = vld [vmem:[#allocation6 + $0xd0] sm:$0xf]
        %v705 = vld [vmem:[#allocation6 + $0xd4] sm:$0xf]
        %v706 = vld [vmem:[#allocation6 + $0xd8] sm:$0xf]
        %v707 = vld [vmem:[#allocation6 + $0xdc] sm:$0xf]
        %v708 = vld [vmem:[#allocation6 + $0xe0] sm:$0xf]
        %v709 = vld [vmem:[#allocation6 + $0xe4] sm:$0xf]
        %v710 = vld [vmem:[#allocation6 + $0xe8] sm:$0xf]
        %v711 = vld [vmem:[#allocation6 + $0xec] sm:$0xf]
        %v712 = vld [vmem:[#allocation6 + $0xf0] sm:$0xf]
        %v713 = vld [vmem:[#allocation6 + $0xf4] sm:$0xf]
        %v714 = vld [vmem:[#allocation6 + $0xf8] sm:$0xf]
        %v715 = vld [vmem:[#allocation6 + $0xfc] sm:$0xf]
        %v732 = vunpack.c.l.b16 %v700
        %v733 = vunpack.c.l.b16 %v701
        %v734 = vunpack.c.l.b16 %v702
        %v735 = vunpack.c.l.b16 %v703
        %v736 = vunpack.c.l.b16 %v704
        %v737 = vunpack.c.l.b16 %v705
        %v738 = vunpack.c.l.b16 %v706
        %v739 = vunpack.c.l.b16 %v707
        %v740 = vunpack.c.l.b16 %v708
        %v741 = vunpack.c.l.b16 %v709
        %v742 = vunpack.c.l.b16 %v710
        %v743 = vunpack.c.l.b16 %v711
        %v744 = vunpack.c.l.b16 %v712
        %v745 = vunpack.c.l.b16 %v713
        %v746 = vunpack.c.l.b16 %v714
        %v747 = vunpack.c.l.b16 %v715
        %v748 = vpack.c.b16 %v733, %v732
        %v749 = vpack.c.b16 %v735, %v734
        %v750 = vpack.c.b16 %v737, %v736
        %v751 = vpack.c.b16 %v739, %v738
        %v752 = vpack.c.b16 %v741, %v740
        %v753 = vpack.c.b16 %v743, %v742
        %v754 = vpack.c.b16 %v745, %v744
        %v755 = vpack.c.b16 %v747, %v746
        %764 = vmatpush.bf16.msra.mxu0 %v755
        %765 = vmatpush.bf16.msra.mxu0 %v754
        %766 = vmatpush.bf16.msra.mxu0 %v753
        %767 = vmatpush.bf16.msra.mxu0 %v752
        %768 = vmatpush.bf16.msra.mxu0 %v751
        %769 = vmatpush.bf16.msra.mxu0 %v750
        %770 = vmatpush.bf16.msra.mxu0 %v749
        %771 = vmatpush.bf16.msra.mxu0 %v748
        %772 = vmatmul.bf16.gmra.mxu0 %v696
        %v773 = vpop.f32.mrf.mxu0
        %v774 = vadd.f32 0.0, %v773
        %v775 = vpop.f32.mrf.mxu0
        %v776 = vadd.f32 0.0, %v775
        %777 = vmatmul.bf16.gmra.mxu0 %v697
        %v778 = vpop.f32.mrf.mxu0
        %v779 = vadd.f32 0.0, %v778
        %v780 = vpop.f32.mrf.mxu0
        %v781 = vadd.f32 0.0, %v780
        %782 = vmatmul.bf16.gmra.mxu0 %v698
        %v783 = vpop.f32.mrf.mxu0
        %v784 = vadd.f32 0.0, %v783
        %v785 = vpop.f32.mrf.mxu0
        %v786 = vadd.f32 0.0, %v785
        %787 = vmatmul.bf16.gmra.mxu0 %v699
        %v788 = vpop.f32.mrf.mxu0
        %v789 = vadd.f32 0.0, %v788
        %v790 = vpop.f32.mrf.mxu0
        %v791 = vadd.f32 0.0, %v790
        %792 = vdwg.mxu0
        %v793 = vadd.f32 %v679, %v774
        %v794 = vadd.f32 %v680, %v776
        %v795 = vadd.f32 %v681, %v779
        %v796 = vadd.f32 %v682, %v781
        %v797 = vadd.f32 %v683, %v784
        %v798 = vadd.f32 %v684, %v786
        %v799 = vadd.f32 %v685, %v789
        %v800 = vadd.f32 %v686, %v791
        %v801 = vld [vmem:[%s687 + $0x1] sm:$0xff]
        %v802 = vld [vmem:[%s687 + $0x11] sm:$0xff]
        %v803 = vld [vmem:[%s687 + $0x21] sm:$0xff]
        %v804 = vld [vmem:[%s687 + $0x31] sm:$0xff]
        %v805 = vld [vmem:[%s687 + $0x41] sm:$0xff]
        %v806 = vld [vmem:[%s687 + $0x51] sm:$0xff]
        %v807 = vld [vmem:[%s687 + $0x61] sm:$0xff]
        %v808 = vld [vmem:[%s687 + $0x71] sm:$0xff]
        %v809 = vpack.c.bf16 %v802, %v801
        %v810 = vpack.c.bf16 %v804, %v803
        %v811 = vpack.c.bf16 %v806, %v805
        %v812 = vpack.c.bf16 %v808, %v807
        %v813 = vld [vmem:[#allocation6 + $0x140] sm:$0xf]
        %v814 = vld [vmem:[#allocation6 + $0x144] sm:$0xf]
        %v815 = vld [vmem:[#allocation6 + $0x148] sm:$0xf]
        %v816 = vld [vmem:[#allocation6 + $0x14c] sm:$0xf]
        %v817 = vld [vmem:[#allocation6 + $0x150] sm:$0xf]
        %v818 = vld [vmem:[#allocation6 + $0x154] sm:$0xf]
        %v819 = vld [vmem:[#allocation6 + $0x158] sm:$0xf]
        %v820 = vld [vmem:[#allocation6 + $0x15c] sm:$0xf]
        %v821 = vld [vmem:[#allocation6 + $0x160] sm:$0xf]
        %v822 = vld [vmem:[#allocation6 + $0x164] sm:$0xf]
        %v823 = vld [vmem:[#allocation6 + $0x168] sm:$0xf]
        %v824 = vld [vmem:[#allocation6 + $0x16c] sm:$0xf]
        %v825 = vld [vmem:[#allocation6 + $0x170] sm:$0xf]
        %v826 = vld [vmem:[#allocation6 + $0x174] sm:$0xf]
        %v827 = vld [vmem:[#allocation6 + $0x178] sm:$0xf]
        %v828 = vld [vmem:[#allocation6 + $0x17c] sm:$0xf]
        %v845 = vunpack.c.l.b16 %v813
        %v846 = vunpack.c.l.b16 %v814
        %v847 = vunpack.c.l.b16 %v815
        %v848 = vunpack.c.l.b16 %v816
        %v849 = vunpack.c.l.b16 %v817
        %v850 = vunpack.c.l.b16 %v818
        %v851 = vunpack.c.l.b16 %v819
        %v852 = vunpack.c.l.b16 %v820
        %v853 = vunpack.c.l.b16 %v821
        %v854 = vunpack.c.l.b16 %v822
        %v855 = vunpack.c.l.b16 %v823
        %v856 = vunpack.c.l.b16 %v824
        %v857 = vunpack.c.l.b16 %v825
        %v858 = vunpack.c.l.b16 %v826
        %v859 = vunpack.c.l.b16 %v827
        %v860 = vunpack.c.l.b16 %v828
        %v861 = vpack.c.b16 %v846, %v845
        %v862 = vpack.c.b16 %v848, %v847
        %v863 = vpack.c.b16 %v850, %v849
        %v864 = vpack.c.b16 %v852, %v851
        %v865 = vpack.c.b16 %v854, %v853
        %v866 = vpack.c.b16 %v856, %v855
        %v867 = vpack.c.b16 %v858, %v857
        %v868 = vpack.c.b16 %v860, %v859
        %877 = vmatpush.bf16.msra.mxu0 %v868
        %878 = vmatpush.bf16.msra.mxu0 %v867
        %879 = vmatpush.bf16.msra.mxu0 %v866
        %880 = vmatpush.bf16.msra.mxu0 %v865
        %881 = vmatpush.bf16.msra.mxu0 %v864
        %882 = vmatpush.bf16.msra.mxu0 %v863
        %883 = vmatpush.bf16.msra.mxu0 %v862
        %884 = vmatpush.bf16.msra.mxu0 %v861
        %885 = vmatmul.bf16.gmra.mxu0 %v809
        %v886 = vpop.f32.mrf.mxu0
        %v887 = vadd.f32 0.0, %v886
        %v888 = vpop.f32.mrf.mxu0
        %v889 = vadd.f32 0.0, %v888
        %890 = vmatmul.bf16.gmra.mxu0 %v810
        %v891 = vpop.f32.mrf.mxu0
        %v892 = vadd.f32 0.0, %v891
        %v893 = vpop.f32.mrf.mxu0
        %v894 = vadd.f32 0.0, %v893
        %895 = vmatmul.bf16.gmra.mxu0 %v811
        %v896 = vpop.f32.mrf.mxu0
        %v897 = vadd.f32 0.0, %v896
        %v898 = vpop.f32.mrf.mxu0
        %v899 = vadd.f32 0.0, %v898
        %900 = vmatmul.bf16.gmra.mxu0 %v812
        %v901 = vpop.f32.mrf.mxu0
        %v902 = vadd.f32 0.0, %v901
        %v903 = vpop.f32.mrf.mxu0
        %v904 = vadd.f32 0.0, %v903
        %905 = vdwg.mxu0
        %v906 = vadd.f32 %v793, %v887
        %v907 = vadd.f32 %v794, %v889
        %v908 = vadd.f32 %v795, %v892
        %v909 = vadd.f32 %v796, %v894
        %v910 = vadd.f32 %v797, %v897
        %v911 = vadd.f32 %v798, %v899
        %v912 = vadd.f32 %v799, %v902
        %v913 = vadd.f32 %v800, %v904
        %s914 = scalar_lea.vmem %s311, 16 [#allocation3]
        %v915 = vld [vmem:[%s914] sm:$0xff]
        %v916 = vld [vmem:[%s914 + $0x10] sm:$0xff]
        %v917 = vld [vmem:[%s914 + $0x20] sm:$0xff]
        %v918 = vld [vmem:[%s914 + $0x30] sm:$0xff]
        %v919 = vld [vmem:[%s914 + $0x40] sm:$0xff]
        %v920 = vld [vmem:[%s914 + $0x50] sm:$0xff]
        %v921 = vld [vmem:[%s914 + $0x60] sm:$0xff]
        %v922 = vld [vmem:[%s914 + $0x70] sm:$0xff]
        %v923 = vpack.c.bf16 %v916, %v915
        %v924 = vpack.c.bf16 %v918, %v917
        %v925 = vpack.c.bf16 %v920, %v919
        %v926 = vpack.c.bf16 %v922, %v921
        %v927 = vld [vmem:[#allocation6 + $0x180] sm:$0xf]
        %v928 = vld [vmem:[#allocation6 + $0x184] sm:$0xf]
        %v929 = vld [vmem:[#allocation6 + $0x188] sm:$0xf]
        %v930 = vld [vmem:[#allocation6 + $0x18c] sm:$0xf]
        %v931 = vld [vmem:[#allocation6 + $0x190] sm:$0xf]
        %v932 = vld [vmem:[#allocation6 + $0x194] sm:$0xf]
        %v933 = vld [vmem:[#allocation6 + $0x198] sm:$0xf]
        %v934 = vld [vmem:[#allocation6 + $0x19c] sm:$0xf]
        %v935 = vld [vmem:[#allocation6 + $0x1a0] sm:$0xf]
        %v936 = vld [vmem:[#allocation6 + $0x1a4] sm:$0xf]
        %v937 = vld [vmem:[#allocation6 + $0x1a8] sm:$0xf]
        %v938 = vld [vmem:[#allocation6 + $0x1ac] sm:$0xf]
        %v939 = vld [vmem:[#allocation6 + $0x1b0] sm:$0xf]
        %v940 = vld [vmem:[#allocation6 + $0x1b4] sm:$0xf]
        %v941 = vld [vmem:[#allocation6 + $0x1b8] sm:$0xf]
        %v942 = vld [vmem:[#allocation6 + $0x1bc] sm:$0xf]
        %v959 = vunpack.c.l.b16 %v927
        %v960 = vunpack.c.l.b16 %v928
        %v961 = vunpack.c.l.b16 %v929
        %v962 = vunpack.c.l.b16 %v930
        %v963 = vunpack.c.l.b16 %v931
        %v964 = vunpack.c.l.b16 %v932
        %v965 = vunpack.c.l.b16 %v933
        %v966 = vunpack.c.l.b16 %v934
        %v967 = vunpack.c.l.b16 %v935
        %v968 = vunpack.c.l.b16 %v936
        %v969 = vunpack.c.l.b16 %v937
        %v970 = vunpack.c.l.b16 %v938
        %v971 = vunpack.c.l.b16 %v939
        %v972 = vunpack.c.l.b16 %v940
        %v973 = vunpack.c.l.b16 %v941
        %v974 = vunpack.c.l.b16 %v942
        %v975 = vpack.c.b16 %v960, %v959
        %v976 = vpack.c.b16 %v962, %v961
        %v977 = vpack.c.b16 %v964, %v963
        %v978 = vpack.c.b16 %v966, %v965
        %v979 = vpack.c.b16 %v968, %v967
        %v980 = vpack.c.b16 %v970, %v969
        %v981 = vpack.c.b16 %v972, %v971
        %v982 = vpack.c.b16 %v974, %v973
        %991 = vmatpush.bf16.msra.mxu0 %v982
        %992 = vmatpush.bf16.msra.mxu0 %v981
        %993 = vmatpush.bf16.msra.mxu0 %v980
        %994 = vmatpush.bf16.msra.mxu0 %v979
        %995 = vmatpush.bf16.msra.mxu0 %v978
        %996 = vmatpush.bf16.msra.mxu0 %v977
        %997 = vmatpush.bf16.msra.mxu0 %v976
        %998 = vmatpush.bf16.msra.mxu0 %v975
        %999 = vmatmul.bf16.gmra.mxu0 %v923
        %v1000 = vpop.f32.mrf.mxu0
        %v1001 = vadd.f32 0.0, %v1000
        %v1002 = vpop.f32.mrf.mxu0
        %v1003 = vadd.f32 0.0, %v1002
        %1004 = vmatmul.bf16.gmra.mxu0 %v924
        %v1005 = vpop.f32.mrf.mxu0
        %v1006 = vadd.f32 0.0, %v1005
        %v1007 = vpop.f32.mrf.mxu0
        %v1008 = vadd.f32 0.0, %v1007
        %1009 = vmatmul.bf16.gmra.mxu0 %v925
        %v1010 = vpop.f32.mrf.mxu0
        %v1011 = vadd.f32 0.0, %v1010
        %v1012 = vpop.f32.mrf.mxu0
        %v1013 = vadd.f32 0.0, %v1012
        %1014 = vmatmul.bf16.gmra.mxu0 %v926
        %v1015 = vpop.f32.mrf.mxu0
        %v1016 = vadd.f32 0.0, %v1015
        %v1017 = vpop.f32.mrf.mxu0
        %v1018 = vadd.f32 0.0, %v1017
        %1019 = vdwg.mxu0
        %v1020 = vadd.f32 %v906, %v1001
        %v1021 = vadd.f32 %v907, %v1003
        %v1022 = vadd.f32 %v908, %v1006
        %v1023 = vadd.f32 %v909, %v1008
        %v1024 = vadd.f32 %v910, %v1011
        %v1025 = vadd.f32 %v911, %v1013
        %v1026 = vadd.f32 %v912, %v1016
        %v1027 = vadd.f32 %v913, %v1018
        %s1028 = scalar_lea.vmem %s311, 160 [#allocation3]
        %v1029 = vld [vmem:[%s1028] sm:$0xff]
        %v1030 = vld [vmem:[%s1028 + $0x10] sm:$0xff]
        %v1031 = vld [vmem:[%s1028 + $0x20] sm:$0xff]
        %v1032 = vld [vmem:[%s1028 + $0x30] sm:$0xff]
        %v1033 = vld [vmem:[%s1028 + $0x40] sm:$0xff]
        %v1034 = vld [vmem:[%s1028 + $0x50] sm:$0xff]
        %v1035 = vld [vmem:[%s1028 + $0x60] sm:$0xff]
        %v1036 = vld [vmem:[%s1028 + $0x70] sm:$0xff]
        %v1037 = vpack.c.bf16 %v1030, %v1029
        %v1038 = vpack.c.bf16 %v1032, %v1031
        %v1039 = vpack.c.bf16 %v1034, %v1033
        %v1040 = vpack.c.bf16 %v1036, %v1035
        %v1041 = vld [vmem:[#allocation6 + $0x1c0] sm:$0xf]
        %v1042 = vld [vmem:[#allocation6 + $0x1c4] sm:$0xf]
        %v1043 = vld [vmem:[#allocation6 + $0x1c8] sm:$0xf]
        %v1044 = vld [vmem:[#allocation6 + $0x1cc] sm:$0xf]
        %v1045 = vld [vmem:[#allocation6 + $0x1d0] sm:$0xf]
        %v1046 = vld [vmem:[#allocation6 + $0x1d4] sm:$0xf]
        %v1047 = vld [vmem:[#allocation6 + $0x1d8] sm:$0xf]
        %v1048 = vld [vmem:[#allocation6 + $0x1dc] sm:$0xf]
        %v1049 = vld [vmem:[#allocation6 + $0x1e0] sm:$0xf]
        %v1050 = vld [vmem:[#allocation6 + $0x1e4] sm:$0xf]
        %v1051 = vld [vmem:[#allocation6 + $0x1e8] sm:$0xf]
        %v1052 = vld [vmem:[#allocation6 + $0x1ec] sm:$0xf]
        %v1053 = vld [vmem:[#allocation6 + $0x1f0] sm:$0xf]
        %v1054 = vld [vmem:[#allocation6 + $0x1f4] sm:$0xf]
        %v1055 = vld [vmem:[#allocation6 + $0x1f8] sm:$0xf]
        %v1056 = vld [vmem:[#allocation6 + $0x1fc] sm:$0xf]
        %v1073 = vunpack.c.l.b16 %v1041
        %v1074 = vunpack.c.l.b16 %v1042
        %v1075 = vunpack.c.l.b16 %v1043
        %v1076 = vunpack.c.l.b16 %v1044
        %v1077 = vunpack.c.l.b16 %v1045
        %v1078 = vunpack.c.l.b16 %v1046
        %v1079 = vunpack.c.l.b16 %v1047
        %v1080 = vunpack.c.l.b16 %v1048
        %v1081 = vunpack.c.l.b16 %v1049
        %v1082 = vunpack.c.l.b16 %v1050
        %v1083 = vunpack.c.l.b16 %v1051
        %v1084 = vunpack.c.l.b16 %v1052
        %v1085 = vunpack.c.l.b16 %v1053
        %v1086 = vunpack.c.l.b16 %v1054
        %v1087 = vunpack.c.l.b16 %v1055
        %v1088 = vunpack.c.l.b16 %v1056
        %v1089 = vpack.c.b16 %v1074, %v1073
        %v1090 = vpack.c.b16 %v1076, %v1075
        %v1091 = vpack.c.b16 %v1078, %v1077
        %v1092 = vpack.c.b16 %v1080, %v1079
        %v1093 = vpack.c.b16 %v1082, %v1081
        %v1094 = vpack.c.b16 %v1084, %v1083
        %v1095 = vpack.c.b16 %v1086, %v1085
        %v1096 = vpack.c.b16 %v1088, %v1087
        %1105 = vmatpush.bf16.msra.mxu0 %v1096
        %1106 = vmatpush.bf16.msra.mxu0 %v1095
        %1107 = vmatpush.bf16.msra.mxu0 %v1094
        %1108 = vmatpush.bf16.msra.mxu0 %v1093
        %1109 = vmatpush.bf16.msra.mxu0 %v1092
        %1110 = vmatpush.bf16.msra.mxu0 %v1091
        %1111 = vmatpush.bf16.msra.mxu0 %v1090
        %1112 = vmatpush.bf16.msra.mxu0 %v1089
        %1113 = vmatmul.bf16.gmra.mxu0 %v1037
        %v1114 = vpop.f32.mrf.mxu0
        %v1115 = vadd.f32 0.0, %v1114
        %v1116 = vpop.f32.mrf.mxu0
        %v1117 = vadd.f32 0.0, %v1116
        %1118 = vmatmul.bf16.gmra.mxu0 %v1038
        %v1119 = vpop.f32.mrf.mxu0
        %v1120 = vadd.f32 0.0, %v1119
        %v1121 = vpop.f32.mrf.mxu0
        %v1122 = vadd.f32 0.0, %v1121
        %1123 = vmatmul.bf16.gmra.mxu0 %v1039
        %v1124 = vpop.f32.mrf.mxu0
        %v1125 = vadd.f32 0.0, %v1124
        %v1126 = vpop.f32.mrf.mxu0
        %v1127 = vadd.f32 0.0, %v1126
        %1128 = vmatmul.bf16.gmra.mxu0 %v1040
        %v1129 = vpop.f32.mrf.mxu0
        %v1130 = vadd.f32 0.0, %v1129
        %v1131 = vpop.f32.mrf.mxu0
        %v1132 = vadd.f32 0.0, %v1131
        %1133 = vdwg.mxu0
        %v1134 = vadd.f32 %v1020, %v1115
        %v1135 = vadd.f32 %v1021, %v1117
        %v1136 = vadd.f32 %v1022, %v1120
        %v1137 = vadd.f32 %v1023, %v1122
        %v1138 = vadd.f32 %v1024, %v1125
        %v1139 = vadd.f32 %v1025, %v1127
        %v1140 = vadd.f32 %v1026, %v1130
        %v1141 = vadd.f32 %v1027, %v1132
        %v1142 = vld [vmem:[%s914 + $0x1] sm:$0xff]
        %v1143 = vld [vmem:[%s914 + $0x11] sm:$0xff]
        %v1144 = vld [vmem:[%s914 + $0x21] sm:$0xff]
        %v1145 = vld [vmem:[%s914 + $0x31] sm:$0xff]
        %v1146 = vld [vmem:[%s914 + $0x41] sm:$0xff]
        %v1147 = vld [vmem:[%s914 + $0x51] sm:$0xff]
        %v1148 = vld [vmem:[%s914 + $0x61] sm:$0xff]
        %v1149 = vld [vmem:[%s914 + $0x71] sm:$0xff]
        %v1150 = vpack.c.bf16 %v1143, %v1142
        %v1151 = vpack.c.bf16 %v1145, %v1144
        %v1152 = vpack.c.bf16 %v1147, %v1146
        %v1153 = vpack.c.bf16 %v1149, %v1148
        %v1154 = vld [vmem:[#allocation6 + $0x200] sm:$0xf]
        %v1155 = vld [vmem:[#allocation6 + $0x204] sm:$0xf]
        %v1156 = vld [vmem:[#allocation6 + $0x208] sm:$0xf]
        %v1157 = vld [vmem:[#allocation6 + $0x20c] sm:$0xf]
        %v1158 = vld [vmem:[#allocation6 + $0x210] sm:$0xf]
        %v1159 = vld [vmem:[#allocation6 + $0x214] sm:$0xf]
        %v1160 = vld [vmem:[#allocation6 + $0x218] sm:$0xf]
        %v1161 = vld [vmem:[#allocation6 + $0x21c] sm:$0xf]
        %v1162 = vld [vmem:[#allocation6 + $0x220] sm:$0xf]
        %v1163 = vld [vmem:[#allocation6 + $0x224] sm:$0xf]
        %v1164 = vld [vmem:[#allocation6 + $0x228] sm:$0xf]
        %v1165 = vld [vmem:[#allocation6 + $0x22c] sm:$0xf]
        %v1166 = vld [vmem:[#allocation6 + $0x230] sm:$0xf]
        %v1167 = vld [vmem:[#allocation6 + $0x234] sm:$0xf]
        %v1168 = vld [vmem:[#allocation6 + $0x238] sm:$0xf]
        %v1169 = vld [vmem:[#allocation6 + $0x23c] sm:$0xf]
        %v1186 = vunpack.c.l.b16 %v1154
        %v1187 = vunpack.c.l.b16 %v1155
        %v1188 = vunpack.c.l.b16 %v1156
        %v1189 = vunpack.c.l.b16 %v1157
        %v1190 = vunpack.c.l.b16 %v1158
        %v1191 = vunpack.c.l.b16 %v1159
        %v1192 = vunpack.c.l.b16 %v1160
        %v1193 = vunpack.c.l.b16 %v1161
        %v1194 = vunpack.c.l.b16 %v1162
        %v1195 = vunpack.c.l.b16 %v1163
        %v1196 = vunpack.c.l.b16 %v1164
        %v1197 = vunpack.c.l.b16 %v1165
        %v1198 = vunpack.c.l.b16 %v1166
        %v1199 = vunpack.c.l.b16 %v1167
        %v1200 = vunpack.c.l.b16 %v1168
        %v1201 = vunpack.c.l.b16 %v1169
        %v1202 = vpack.c.b16 %v1187, %v1186
        %v1203 = vpack.c.b16 %v1189, %v1188
        %v1204 = vpack.c.b16 %v1191, %v1190
        %v1205 = vpack.c.b16 %v1193, %v1192
        %v1206 = vpack.c.b16 %v1195, %v1194
        %v1207 = vpack.c.b16 %v1197, %v1196
        %v1208 = vpack.c.b16 %v1199, %v1198
        %v1209 = vpack.c.b16 %v1201, %v1200
        %1218 = vmatpush.bf16.msra.mxu0 %v1209
        %1219 = vmatpush.bf16.msra.mxu0 %v1208
        %1220 = vmatpush.bf16.msra.mxu0 %v1207
        %1221 = vmatpush.bf16.msra.mxu0 %v1206
        %1222 = vmatpush.bf16.msra.mxu0 %v1205
        %1223 = vmatpush.bf16.msra.mxu0 %v1204
        %1224 = vmatpush.bf16.msra.mxu0 %v1203
        %1225 = vmatpush.bf16.msra.mxu0 %v1202
        %1226 = vmatmul.bf16.gmra.mxu0 %v1150
        %v1227 = vpop.f32.mrf.mxu0
        %v1228 = vadd.f32 0.0, %v1227
        %v1229 = vpop.f32.mrf.mxu0
        %v1230 = vadd.f32 0.0, %v1229
        %1231 = vmatmul.bf16.gmra.mxu0 %v1151
        %v1232 = vpop.f32.mrf.mxu0
        %v1233 = vadd.f32 0.0, %v1232
        %v1234 = vpop.f32.mrf.mxu0
        %v1235 = vadd.f32 0.0, %v1234
        %1236 = vmatmul.bf16.gmra.mxu0 %v1152
        %v1237 = vpop.f32.mrf.mxu0
        %v1238 = vadd.f32 0.0, %v1237
        %v1239 = vpop.f32.mrf.mxu0
        %v1240 = vadd.f32 0.0, %v1239
        %1241 = vmatmul.bf16.gmra.mxu0 %v1153
        %v1242 = vpop.f32.mrf.mxu0
        %v1243 = vadd.f32 0.0, %v1242
        %v1244 = vpop.f32.mrf.mxu0
        %v1245 = vadd.f32 0.0, %v1244
        %1246 = vdwg.mxu0
        %v1247 = vadd.f32 %v1134, %v1228
        %v1248 = vadd.f32 %v1135, %v1230
        %v1249 = vadd.f32 %v1136, %v1233
        %v1250 = vadd.f32 %v1137, %v1235
        %v1251 = vadd.f32 %v1138, %v1238
        %v1252 = vadd.f32 %v1139, %v1240
        %v1253 = vadd.f32 %v1140, %v1243
        %v1254 = vadd.f32 %v1141, %v1245
        %s1255 = scalar_lea.vmem %s311, 432 [#allocation3]
        %v1256 = vld [vmem:[%s1255] sm:$0xff]
        %v1257 = vld [vmem:[%s1255 + $0x10] sm:$0xff]
        %v1258 = vld [vmem:[%s1255 + $0x20] sm:$0xff]
        %v1259 = vld [vmem:[%s1255 + $0x30] sm:$0xff]
        %v1260 = vld [vmem:[%s1255 + $0x40] sm:$0xff]
        %v1261 = vld [vmem:[%s1255 + $0x50] sm:$0xff]
        %v1262 = vld [vmem:[%s1255 + $0x60] sm:$0xff]
        %v1263 = vld [vmem:[%s1255 + $0x70] sm:$0xff]
        %v1264 = vpack.c.bf16 %v1257, %v1256
        %v1265 = vpack.c.bf16 %v1259, %v1258
        %v1266 = vpack.c.bf16 %v1261, %v1260
        %v1267 = vpack.c.bf16 %v1263, %v1262
        %v1268 = vld [vmem:[#allocation11] sm:$0xff]
        %v1269 = vld [vmem:[#allocation11 + $0x8] sm:$0xff]
        %v1270 = vld [vmem:[#allocation11 + $0x10] sm:$0xff]
        %v1271 = vld [vmem:[#allocation11 + $0x18] sm:$0xff]
        %v1272 = vld [vmem:[#allocation11 + $0x20] sm:$0xff]
        %v1273 = vld [vmem:[#allocation11 + $0x28] sm:$0xff]
        %v1274 = vld [vmem:[#allocation11 + $0x30] sm:$0xff]
        %v1275 = vld [vmem:[#allocation11 + $0x38] sm:$0xff]
        %v1276 = vld [vmem:[#allocation11 + $0x40] sm:$0xff]
        %v1277 = vld [vmem:[#allocation11 + $0x48] sm:$0xff]
        %v1278 = vld [vmem:[#allocation11 + $0x50] sm:$0xff]
        %v1279 = vld [vmem:[#allocation11 + $0x58] sm:$0xff]
        %v1280 = vld [vmem:[#allocation11 + $0x60] sm:$0xff]
        %v1281 = vld [vmem:[#allocation11 + $0x68] sm:$0xff]
        %v1282 = vld [vmem:[#allocation11 + $0x70] sm:$0xff]
        %v1283 = vld [vmem:[#allocation11 + $0x78] sm:$0xff]
        %v1300 = vunpack.c.l.b16 %v1268
        %v1301 = vunpack.c.h.b16 %v1268
        %v1302 = vunpack.c.l.b16 %v1269
        %v1303 = vunpack.c.h.b16 %v1269
        %v1304 = vunpack.c.l.b16 %v1270
        %v1305 = vunpack.c.h.b16 %v1270
        %v1306 = vunpack.c.l.b16 %v1271
        %v1307 = vunpack.c.h.b16 %v1271
        %v1308 = vunpack.c.l.b16 %v1272
        %v1309 = vunpack.c.h.b16 %v1272
        %v1310 = vunpack.c.l.b16 %v1273
        %v1311 = vunpack.c.h.b16 %v1273
        %v1312 = vunpack.c.l.b16 %v1274
        %v1313 = vunpack.c.h.b16 %v1274
        %v1314 = vunpack.c.l.b16 %v1275
        %v1315 = vunpack.c.h.b16 %v1275
        %v1316 = vunpack.c.l.b16 %v1276
        %v1317 = vunpack.c.h.b16 %v1276
        %v1318 = vunpack.c.l.b16 %v1277
        %v1319 = vunpack.c.h.b16 %v1277
        %v1320 = vunpack.c.l.b16 %v1278
        %v1321 = vunpack.c.h.b16 %v1278
        %v1322 = vunpack.c.l.b16 %v1279
        %v1323 = vunpack.c.h.b16 %v1279
        %v1324 = vunpack.c.l.b16 %v1280
        %v1325 = vunpack.c.h.b16 %v1280
        %v1326 = vunpack.c.l.b16 %v1281
        %v1327 = vunpack.c.h.b16 %v1281
        %v1328 = vunpack.c.l.b16 %v1282
        %v1329 = vunpack.c.h.b16 %v1282
        %v1330 = vunpack.c.l.b16 %v1283
        %v1331 = vunpack.c.h.b16 %v1283
        %v1332 = vpack.c.b16 %v1302, %v1300
        %v1333 = vpack.c.b16 %v1303, %v1301
        %v1334 = vpack.c.b16 %v1306, %v1304
        %v1335 = vpack.c.b16 %v1307, %v1305
        %v1336 = vpack.c.b16 %v1310, %v1308
        %v1337 = vpack.c.b16 %v1311, %v1309
        %v1338 = vpack.c.b16 %v1314, %v1312
        %v1339 = vpack.c.b16 %v1315, %v1313
        %v1340 = vpack.c.b16 %v1318, %v1316
        %v1341 = vpack.c.b16 %v1319, %v1317
        %v1342 = vpack.c.b16 %v1322, %v1320
        %v1343 = vpack.c.b16 %v1323, %v1321
        %v1344 = vpack.c.b16 %v1326, %v1324
        %v1345 = vpack.c.b16 %v1327, %v1325
        %v1346 = vpack.c.b16 %v1330, %v1328
        %v1347 = vpack.c.b16 %v1331, %v1329
        %1364 = vmatpush.bf16.msra.mxu0 %v1346
        %1365 = vmatpush.bf16.msra.mxu0 %v1344
        %1366 = vmatpush.bf16.msra.mxu0 %v1342
        %1367 = vmatpush.bf16.msra.mxu0 %v1340
        %1368 = vmatpush.bf16.msra.mxu0 %v1338
        %1369 = vmatpush.bf16.msra.mxu0 %v1336
        %1370 = vmatpush.bf16.msra.mxu0 %v1334
        %1371 = vmatpush.bf16.msra.mxu0 %v1332
        %1372 = vmatmul.bf16.gmra.mxu0 %v1264
        %v1373 = vpop.f32.mrf.mxu0
        %v1374 = vadd.f32 0.0, %v1373
        %v1375 = vpop.f32.mrf.mxu0
        %v1376 = vadd.f32 0.0, %v1375
        %1377 = vmatmul.bf16.gmra.mxu0 %v1265
        %v1378 = vpop.f32.mrf.mxu0
        %v1379 = vadd.f32 0.0, %v1378
        %v1380 = vpop.f32.mrf.mxu0
        %v1381 = vadd.f32 0.0, %v1380
        %1382 = vmatmul.bf16.gmra.mxu0 %v1266
        %v1383 = vpop.f32.mrf.mxu0
        %v1384 = vadd.f32 0.0, %v1383
        %v1385 = vpop.f32.mrf.mxu0
        %v1386 = vadd.f32 0.0, %v1385
        %1387 = vmatmul.bf16.gmra.mxu0 %v1267
        %v1388 = vpop.f32.mrf.mxu0
        %v1389 = vadd.f32 0.0, %v1388
        %v1390 = vpop.f32.mrf.mxu0
        %v1391 = vadd.f32 0.0, %v1390
        %1392 = vdwg.mxu0
        %1393 = vmatpush.bf16.msra.mxu0 %v1347
        %1394 = vmatpush.bf16.msra.mxu0 %v1345
        %1395 = vmatpush.bf16.msra.mxu0 %v1343
        %1396 = vmatpush.bf16.msra.mxu0 %v1341
        %1397 = vmatpush.bf16.msra.mxu0 %v1339
        %1398 = vmatpush.bf16.msra.mxu0 %v1337
        %1399 = vmatpush.bf16.msra.mxu0 %v1335
        %1400 = vmatpush.bf16.msra.mxu0 %v1333
        %1401 = vmatmul.bf16.gmra.mxu0 %v1264
        %v1402 = vpop.f32.mrf.mxu0
        %v1403 = vadd.f32 0.0, %v1402
        %v1404 = vpop.f32.mrf.mxu0
        %v1405 = vadd.f32 0.0, %v1404
        %1406 = vmatmul.bf16.gmra.mxu0 %v1265
        %v1407 = vpop.f32.mrf.mxu0
        %v1408 = vadd.f32 0.0, %v1407
        %v1409 = vpop.f32.mrf.mxu0
        %v1410 = vadd.f32 0.0, %v1409
        %1411 = vmatmul.bf16.gmra.mxu0 %v1266
        %v1412 = vpop.f32.mrf.mxu0
        %v1413 = vadd.f32 0.0, %v1412
        %v1414 = vpop.f32.mrf.mxu0
        %v1415 = vadd.f32 0.0, %v1414
        %1416 = vmatmul.bf16.gmra.mxu0 %v1267
        %v1417 = vpop.f32.mrf.mxu0
        %v1418 = vadd.f32 0.0, %v1417
        %v1419 = vpop.f32.mrf.mxu0
        %v1420 = vadd.f32 0.0, %v1419
        %1421 = vdwg.mxu0
        %v1422 = vadd.f32 %v1247, %v1374
        %v1423 = vadd.f32 %v1248, %v1376
        %v1424 = vadd.f32 %v1249, %v1379
        %v1425 = vadd.f32 %v1250, %v1381
        %v1426 = vadd.f32 %v1251, %v1384
        %v1427 = vadd.f32 %v1252, %v1386
        %v1428 = vadd.f32 %v1253, %v1389
        %v1429 = vadd.f32 %v1254, %v1391
        %v1430 = vld [vmem:[%s6] sm:$0x1]
        %v1431 = vperm.slane %v1430, 0
        %v1432 = vmul.f32 %v1403, %v1431
        %v1433 = vmul.f32 %v1405, %v1431
        %v1434 = vmul.f32 %v1408, %v1431
        %v1435 = vmul.f32 %v1410, %v1431
        %v1436 = vmul.f32 %v1413, %v1431
        %v1437 = vmul.f32 %v1415, %v1431
        %v1438 = vmul.f32 %v1418, %v1431
        %v1439 = vmul.f32 %v1420, %v1431
        %v1440 = vld [vmem:[%s6 + $0x1] sm:$0x1]
        %v1441 = vperm.slane %v1440, 0
        %v1442 = vadd.f32 %v1432, %v1441
        %v1443 = vadd.f32 %v1433, %v1441
        %v1444 = vadd.f32 %v1434, %v1441
        %v1445 = vadd.f32 %v1435, %v1441
        %v1446 = vadd.f32 %v1436, %v1441
        %v1447 = vadd.f32 %v1437, %v1441
        %v1448 = vadd.f32 %v1438, %v1441
        %v1449 = vadd.f32 %v1439, %v1441
        %v1450 = vld [vmem:[#allocation8] sm:$0x1]
        %v1451 = vperm.slane %v1450, 0
        %v1452 = vmul.f32 %v1422, %v1451
        %v1453 = vmul.f32 %v1423, %v1451
        %v1454 = vmul.f32 %v1424, %v1451
        %v1455 = vmul.f32 %v1425, %v1451
        %v1456 = vmul.f32 %v1426, %v1451
        %v1457 = vmul.f32 %v1427, %v1451
        %v1458 = vmul.f32 %v1428, %v1451
        %v1459 = vmul.f32 %v1429, %v1451
        %v1460 = vld [vmem:[#allocation8 + $0x1] sm:$0x1]
        %v1461 = vperm.slane %v1460, 0
        %v1462 = vadd.f32 %v1452, %v1461
        %v1463 = vadd.f32 %v1453, %v1461
        %v1464 = vadd.f32 %v1454, %v1461
        %v1465 = vadd.f32 %v1455, %v1461
        %v1466 = vadd.f32 %v1456, %v1461
        %v1467 = vadd.f32 %v1457, %v1461
        %v1468 = vadd.f32 %v1458, %v1461
        %v1469 = vadd.f32 %v1459, %v1461
        %v1470 = vmax.f32 %v1462, 0.0
        %v1471 = vmax.f32 %v1463, 0.0
        %v1472 = vmax.f32 %v1464, 0.0
        %v1473 = vmax.f32 %v1465, 0.0
        %v1474 = vmax.f32 %v1466, 0.0
        %v1475 = vmax.f32 %v1467, 0.0
        %v1476 = vmax.f32 %v1468, 0.0
        %v1477 = vmax.f32 %v1469, 0.0
        %1478 = vst [vmem:[#allocation2] sm:$0xff] 0.0
        %1479 = vst [vmem:[#allocation2 + $0x8] sm:$0xff] 0.0
        %s1480 = scalar_lea.vmem [#allocation2], 144
        %1481 = vst [vmem:[%s1480] sm:$0xff] 0.0
        %1482 = vst [vmem:[%s1480 + $0x8] sm:$0xff] 0.0
        %1483 = vst [vmem:[#allocation2] sm:$0x1] 0.0
        %1484 = vst [vmem:[#allocation2 + $0x10] sm:$0x1] 0.0
        %1485 = vst [vmem:[#allocation2 + $0x20] sm:$0x1] 0.0
        %1486 = vst [vmem:[#allocation2 + $0x30] sm:$0x1] 0.0
        %1487 = vst [vmem:[#allocation2 + $0x40] sm:$0x1] 0.0
        %1488 = vst [vmem:[#allocation2 + $0x50] sm:$0x1] 0.0
        %1489 = vst [vmem:[#allocation2 + $0x60] sm:$0x1] 0.0
        %1490 = vst [vmem:[#allocation2 + $0x70] sm:$0x1] 0.0
        %1491 = vst [vmem:[#allocation2 + $0x80] sm:$0x1] 0.0
        %1492 = vst [vmem:[#allocation2 + $0x90] sm:$0x1] 0.0
        %1493 = vst [vmem:[#allocation2 + $0x9] sm:$0x1] 0.0
        %1494 = vst [vmem:[#allocation2 + $0x19] sm:$0x1] 0.0
        %1495 = vst [vmem:[#allocation2 + $0x29] sm:$0x1] 0.0
        %1496 = vst [vmem:[#allocation2 + $0x39] sm:$0x1] 0.0
        %1497 = vst [vmem:[#allocation2 + $0x49] sm:$0x1] 0.0
        %1498 = vst [vmem:[#allocation2 + $0x59] sm:$0x1] 0.0
        %1499 = vst [vmem:[#allocation2 + $0x69] sm:$0x1] 0.0
        %1500 = vst [vmem:[#allocation2 + $0x79] sm:$0x1] 0.0
        %1501 = vst [vmem:[#allocation2 + $0x89] sm:$0x1] 0.0
        %1502 = vst [vmem:[#allocation2 + $0x99] sm:$0x1] 0.0
        %s1503 = scalar_lea.vmem [#allocation2], 16
        %1504 = vst [vmem:[%s1503 + $0x1] sm:$0xff] %v1470
        %1505 = vst [vmem:[%s1503 + $0x11] sm:$0xff] %v1471
        %1506 = vst [vmem:[%s1503 + $0x21] sm:$0xff] %v1472
        %1507 = vst [vmem:[%s1503 + $0x31] sm:$0xff] %v1473
        %1508 = vst [vmem:[%s1503 + $0x41] sm:$0xff] %v1474
        %1509 = vst [vmem:[%s1503 + $0x51] sm:$0xff] %v1475
        %1510 = vst [vmem:[%s1503 + $0x61] sm:$0xff] %v1476
        %1511 = vst [vmem:[%s1503 + $0x71] sm:$0xff] %v1477
        %v1512 = vld [vmem:[#allocation2] sm:$0xff]
        %v1513 = vld [vmem:[#allocation2 + $0x10] sm:$0xff]
        %v1514 = vld [vmem:[#allocation2 + $0x20] sm:$0xff]
        %v1515 = vld [vmem:[#allocation2 + $0x30] sm:$0xff]
        %v1516 = vld [vmem:[#allocation2 + $0x40] sm:$0xff]
        %v1517 = vld [vmem:[#allocation2 + $0x50] sm:$0xff]
        %v1518 = vld [vmem:[#allocation2 + $0x60] sm:$0xff]
        %v1519 = vld [vmem:[#allocation2 + $0x70] sm:$0xff]
        %v1520 = vpack.c.bf16 %v1513, %v1512
        %v1521 = vpack.c.bf16 %v1515, %v1514
        %v1522 = vpack.c.bf16 %v1517, %v1516
        %v1523 = vpack.c.bf16 %v1519, %v1518
        %v1524 = vld [vmem:[#allocation9] sm:$0xf]
        %v1525 = vld [vmem:[#allocation9 + $0x4] sm:$0xf]
        %v1526 = vld [vmem:[#allocation9 + $0x8] sm:$0xf]
        %v1527 = vld [vmem:[#allocation9 + $0xc] sm:$0xf]
        %v1528 = vld [vmem:[#allocation9 + $0x10] sm:$0xf]
        %v1529 = vld [vmem:[#allocation9 + $0x14] sm:$0xf]
        %v1530 = vld [vmem:[#allocation9 + $0x18] sm:$0xf]
        %v1531 = vld [vmem:[#allocation9 + $0x1c] sm:$0xf]
        %v1532 = vld [vmem:[#allocation9 + $0x20] sm:$0xf]
        %v1533 = vld [vmem:[#allocation9 + $0x24] sm:$0xf]
        %v1534 = vld [vmem:[#allocation9 + $0x28] sm:$0xf]
        %v1535 = vld [vmem:[#allocation9 + $0x2c] sm:$0xf]
        %v1536 = vld [vmem:[#allocation9 + $0x30] sm:$0xf]
        %v1537 = vld [vmem:[#allocation9 + $0x34] sm:$0xf]
        %v1538 = vld [vmem:[#allocation9 + $0x38] sm:$0xf]
        %v1539 = vld [vmem:[#allocation9 + $0x3c] sm:$0xf]
        %v1540 = vld [vmem:[#allocation2 + $0x1] sm:$0xff]
        %v1541 = vld [vmem:[#allocation2 + $0x11] sm:$0xff]
        %v1542 = vld [vmem:[#allocation2 + $0x21] sm:$0xff]
        %v1543 = vld [vmem:[#allocation2 + $0x31] sm:$0xff]
        %v1544 = vld [vmem:[#allocation2 + $0x41] sm:$0xff]
        %v1545 = vld [vmem:[#allocation2 + $0x51] sm:$0xff]
        %v1546 = vld [vmem:[#allocation2 + $0x61] sm:$0xff]
        %v1547 = vld [vmem:[#allocation2 + $0x71] sm:$0xff]
        %v1548 = vpack.c.bf16 %v1541, %v1540
        %v1549 = vpack.c.bf16 %v1543, %v1542
        %v1550 = vpack.c.bf16 %v1545, %v1544
        %v1551 = vpack.c.bf16 %v1547, %v1546
        %v1552 = vld [vmem:[#allocation9 + $0x40] sm:$0xf]
        %v1553 = vld [vmem:[#allocation9 + $0x44] sm:$0xf]
        %v1554 = vld [vmem:[#allocation9 + $0x48] sm:$0xf]
        %v1555 = vld [vmem:[#allocation9 + $0x4c] sm:$0xf]
        %v1556 = vld [vmem:[#allocation9 + $0x50] sm:$0xf]
        %v1557 = vld [vmem:[#allocation9 + $0x54] sm:$0xf]
        %v1558 = vld [vmem:[#allocation9 + $0x58] sm:$0xf]
        %v1559 = vld [vmem:[#allocation9 + $0x5c] sm:$0xf]
        %v1560 = vld [vmem:[#allocation9 + $0x60] sm:$0xf]
        %v1561 = vld [vmem:[#allocation9 + $0x64] sm:$0xf]
        %v1562 = vld [vmem:[#allocation9 + $0x68] sm:$0xf]
        %v1563 = vld [vmem:[#allocation9 + $0x6c] sm:$0xf]
        %v1564 = vld [vmem:[#allocation9 + $0x70] sm:$0xf]
        %v1565 = vld [vmem:[#allocation9 + $0x74] sm:$0xf]
        %v1566 = vld [vmem:[#allocation9 + $0x78] sm:$0xf]
        %v1567 = vld [vmem:[#allocation9 + $0x7c] sm:$0xf]
        %v1584 = vunpack.c.l.b16 %v1552
        %v1585 = vunpack.c.l.b16 %v1553
        %v1586 = vunpack.c.l.b16 %v1554
        %v1587 = vunpack.c.l.b16 %v1555
        %v1588 = vunpack.c.l.b16 %v1556
        %v1589 = vunpack.c.l.b16 %v1557
        %v1590 = vunpack.c.l.b16 %v1558
        %v1591 = vunpack.c.l.b16 %v1559
        %v1592 = vunpack.c.l.b16 %v1560
        %v1593 = vunpack.c.l.b16 %v1561
        %v1594 = vunpack.c.l.b16 %v1562
        %v1595 = vunpack.c.l.b16 %v1563
        %v1596 = vunpack.c.l.b16 %v1564
        %v1597 = vunpack.c.l.b16 %v1565
        %v1598 = vunpack.c.l.b16 %v1566
        %v1599 = vunpack.c.l.b16 %v1567
        %v1600 = vpack.c.b16 %v1585, %v1584
        %v1601 = vpack.c.b16 %v1587, %v1586
        %v1602 = vpack.c.b16 %v1589, %v1588
        %v1603 = vpack.c.b16 %v1591, %v1590
        %v1604 = vpack.c.b16 %v1593, %v1592
        %v1605 = vpack.c.b16 %v1595, %v1594
        %v1606 = vpack.c.b16 %v1597, %v1596
        %v1607 = vpack.c.b16 %v1599, %v1598
        %1616 = vmatpush.bf16.msra.mxu0 %v1607
        %1617 = vmatpush.bf16.msra.mxu0 %v1606
        %1618 = vmatpush.bf16.msra.mxu0 %v1605
        %1619 = vmatpush.bf16.msra.mxu0 %v1604
        %1620 = vmatpush.bf16.msra.mxu0 %v1603
        %1621 = vmatpush.bf16.msra.mxu0 %v1602
        %1622 = vmatpush.bf16.msra.mxu0 %v1601
        %1623 = vmatpush.bf16.msra.mxu0 %v1600
        %1624 = vmatmul.bf16.gmra.mxu0 %v1548
        %v1625 = vpop.f32.mrf.mxu0
        %v1626 = vadd.f32 0.0, %v1625
        %v1627 = vpop.f32.mrf.mxu0
        %v1628 = vadd.f32 0.0, %v1627
        %1629 = vmatmul.bf16.gmra.mxu0 %v1549
        %v1630 = vpop.f32.mrf.mxu0
        %v1631 = vadd.f32 0.0, %v1630
        %v1632 = vpop.f32.mrf.mxu0
        %v1633 = vadd.f32 0.0, %v1632
        %1634 = vmatmul.bf16.gmra.mxu0 %v1550
        %v1635 = vpop.f32.mrf.mxu0
        %v1636 = vadd.f32 0.0, %v1635
        %v1637 = vpop.f32.mrf.mxu0
        %v1638 = vadd.f32 0.0, %v1637
        %1639 = vmatmul.bf16.gmra.mxu0 %v1551
        %v1640 = vpop.f32.mrf.mxu0
        %v1641 = vadd.f32 0.0, %v1640
        %v1642 = vpop.f32.mrf.mxu0
        %v1643 = vadd.f32 0.0, %v1642
        %1644 = vdwg.mxu0
        %v1661 = vunpack.c.l.b16 %v1524
        %v1662 = vunpack.c.l.b16 %v1525
        %v1663 = vunpack.c.l.b16 %v1526
        %v1664 = vunpack.c.l.b16 %v1527
        %v1665 = vunpack.c.l.b16 %v1528
        %v1666 = vunpack.c.l.b16 %v1529
        %v1667 = vunpack.c.l.b16 %v1530
        %v1668 = vunpack.c.l.b16 %v1531
        %v1669 = vunpack.c.l.b16 %v1532
        %v1670 = vunpack.c.l.b16 %v1533
        %v1671 = vunpack.c.l.b16 %v1534
        %v1672 = vunpack.c.l.b16 %v1535
        %v1673 = vunpack.c.l.b16 %v1536
        %v1674 = vunpack.c.l.b16 %v1537
        %v1675 = vunpack.c.l.b16 %v1538
        %v1676 = vunpack.c.l.b16 %v1539
        %v1677 = vpack.c.b16 %v1662, %v1661
        %v1678 = vpack.c.b16 %v1664, %v1663
        %v1679 = vpack.c.b16 %v1666, %v1665
        %v1680 = vpack.c.b16 %v1668, %v1667
        %v1681 = vpack.c.b16 %v1670, %v1669
        %v1682 = vpack.c.b16 %v1672, %v1671
        %v1683 = vpack.c.b16 %v1674, %v1673
        %v1684 = vpack.c.b16 %v1676, %v1675
        %1693 = vmatpush.bf16.msra.mxu0 %v1684
        %1694 = vmatpush.bf16.msra.mxu0 %v1683
        %1695 = vmatpush.bf16.msra.mxu0 %v1682
        %1696 = vmatpush.bf16.msra.mxu0 %v1681
        %1697 = vmatpush.bf16.msra.mxu0 %v1680
        %1698 = vmatpush.bf16.msra.mxu0 %v1679
        %1699 = vmatpush.bf16.msra.mxu0 %v1678
        %1700 = vmatpush.bf16.msra.mxu0 %v1677
        %1701 = vmatmul.bf16.gmra.mxu0 %v1520
        %v1702 = vpop.f32.mrf.mxu0
        %v1703 = vadd.f32 %v1626, %v1702
        %v1704 = vpop.f32.mrf.mxu0
        %v1705 = vadd.f32 %v1628, %v1704
        %1706 = vmatmul.bf16.gmra.mxu0 %v1521
        %v1707 = vpop.f32.mrf.mxu0
        %v1708 = vadd.f32 %v1631, %v1707
        %v1709 = vpop.f32.mrf.mxu0
        %v1710 = vadd.f32 %v1633, %v1709
        %1711 = vmatmul.bf16.gmra.mxu0 %v1522
        %v1712 = vpop.f32.mrf.mxu0
        %v1713 = vadd.f32 %v1636, %v1712
        %v1714 = vpop.f32.mrf.mxu0
        %v1715 = vadd.f32 %v1638, %v1714
        %1716 = vmatmul.bf16.gmra.mxu0 %v1523
        %v1717 = vpop.f32.mrf.mxu0
        %v1718 = vadd.f32 %v1641, %v1717
        %v1719 = vpop.f32.mrf.mxu0
        %v1720 = vadd.f32 %v1643, %v1719
        %1721 = vdwg.mxu0
        %v1722 = vld [vmem:[#allocation2 + $0x2] sm:$0xff]
        %v1723 = vld [vmem:[#allocation2 + $0x12] sm:$0xff]
        %v1724 = vld [vmem:[#allocation2 + $0x22] sm:$0xff]
        %v1725 = vld [vmem:[#allocation2 + $0x32] sm:$0xff]
        %v1726 = vld [vmem:[#allocation2 + $0x42] sm:$0xff]
        %v1727 = vld [vmem:[#allocation2 + $0x52] sm:$0xff]
        %v1728 = vld [vmem:[#allocation2 + $0x62] sm:$0xff]
        %v1729 = vld [vmem:[#allocation2 + $0x72] sm:$0xff]
        %v1730 = vpack.c.bf16 %v1723, %v1722
        %v1731 = vpack.c.bf16 %v1725, %v1724
        %v1732 = vpack.c.bf16 %v1727, %v1726
        %v1733 = vpack.c.bf16 %v1729, %v1728
        %v1734 = vld [vmem:[#allocation9 + $0x80] sm:$0xf]
        %v1735 = vld [vmem:[#allocation9 + $0x84] sm:$0xf]
        %v1736 = vld [vmem:[#allocation9 + $0x88] sm:$0xf]
        %v1737 = vld [vmem:[#allocation9 + $0x8c] sm:$0xf]
        %v1738 = vld [vmem:[#allocation9 + $0x90] sm:$0xf]
        %v1739 = vld [vmem:[#allocation9 + $0x94] sm:$0xf]
        %v1740 = vld [vmem:[#allocation9 + $0x98] sm:$0xf]
        %v1741 = vld [vmem:[#allocation9 + $0x9c] sm:$0xf]
        %v1742 = vld [vmem:[#allocation9 + $0xa0] sm:$0xf]
        %v1743 = vld [vmem:[#allocation9 + $0xa4] sm:$0xf]
        %v1744 = vld [vmem:[#allocation9 + $0xa8] sm:$0xf]
        %v1745 = vld [vmem:[#allocation9 + $0xac] sm:$0xf]
        %v1746 = vld [vmem:[#allocation9 + $0xb0] sm:$0xf]
        %v1747 = vld [vmem:[#allocation9 + $0xb4] sm:$0xf]
        %v1748 = vld [vmem:[#allocation9 + $0xb8] sm:$0xf]
        %v1749 = vld [vmem:[#allocation9 + $0xbc] sm:$0xf]
        %v1766 = vunpack.c.l.b16 %v1734
        %v1767 = vunpack.c.l.b16 %v1735
        %v1768 = vunpack.c.l.b16 %v1736
        %v1769 = vunpack.c.l.b16 %v1737
        %v1770 = vunpack.c.l.b16 %v1738
        %v1771 = vunpack.c.l.b16 %v1739
        %v1772 = vunpack.c.l.b16 %v1740
        %v1773 = vunpack.c.l.b16 %v1741
        %v1774 = vunpack.c.l.b16 %v1742
        %v1775 = vunpack.c.l.b16 %v1743
        %v1776 = vunpack.c.l.b16 %v1744
        %v1777 = vunpack.c.l.b16 %v1745
        %v1778 = vunpack.c.l.b16 %v1746
        %v1779 = vunpack.c.l.b16 %v1747
        %v1780 = vunpack.c.l.b16 %v1748
        %v1781 = vunpack.c.l.b16 %v1749
        %v1782 = vpack.c.b16 %v1767, %v1766
        %v1783 = vpack.c.b16 %v1769, %v1768
        %v1784 = vpack.c.b16 %v1771, %v1770
        %v1785 = vpack.c.b16 %v1773, %v1772
        %v1786 = vpack.c.b16 %v1775, %v1774
        %v1787 = vpack.c.b16 %v1777, %v1776
        %v1788 = vpack.c.b16 %v1779, %v1778
        %v1789 = vpack.c.b16 %v1781, %v1780
        %1798 = vmatpush.bf16.msra.mxu0 %v1789
        %1799 = vmatpush.bf16.msra.mxu0 %v1788
        %1800 = vmatpush.bf16.msra.mxu0 %v1787
        %1801 = vmatpush.bf16.msra.mxu0 %v1786
        %1802 = vmatpush.bf16.msra.mxu0 %v1785
        %1803 = vmatpush.bf16.msra.mxu0 %v1784
        %1804 = vmatpush.bf16.msra.mxu0 %v1783
        %1805 = vmatpush.bf16.msra.mxu0 %v1782
        %1806 = vmatmul.bf16.gmra.mxu0 %v1730
        %v1807 = vpop.f32.mrf.mxu0
        %v1808 = vadd.f32 0.0, %v1807
        %v1809 = vpop.f32.mrf.mxu0
        %v1810 = vadd.f32 0.0, %v1809
        %1811 = vmatmul.bf16.gmra.mxu0 %v1731
        %v1812 = vpop.f32.mrf.mxu0
        %v1813 = vadd.f32 0.0, %v1812
        %v1814 = vpop.f32.mrf.mxu0
        %v1815 = vadd.f32 0.0, %v1814
        %1816 = vmatmul.bf16.gmra.mxu0 %v1732
        %v1817 = vpop.f32.mrf.mxu0
        %v1818 = vadd.f32 0.0, %v1817
        %v1819 = vpop.f32.mrf.mxu0
        %v1820 = vadd.f32 0.0, %v1819
        %1821 = vmatmul.bf16.gmra.mxu0 %v1733
        %v1822 = vpop.f32.mrf.mxu0
        %v1823 = vadd.f32 0.0, %v1822
        %v1824 = vpop.f32.mrf.mxu0
        %v1825 = vadd.f32 0.0, %v1824
        %1826 = vdwg.mxu0
        %v1827 = vadd.f32 %v1703, %v1808
        %v1828 = vadd.f32 %v1705, %v1810
        %v1829 = vadd.f32 %v1708, %v1813
        %v1830 = vadd.f32 %v1710, %v1815
        %v1831 = vadd.f32 %v1713, %v1818
        %v1832 = vadd.f32 %v1715, %v1820
        %v1833 = vadd.f32 %v1718, %v1823
        %v1834 = vadd.f32 %v1720, %v1825
        %v1835 = vld [vmem:[%s1503] sm:$0xff]
        %v1836 = vld [vmem:[%s1503 + $0x10] sm:$0xff]
        %v1837 = vld [vmem:[%s1503 + $0x20] sm:$0xff]
        %v1838 = vld [vmem:[%s1503 + $0x30] sm:$0xff]
        %v1839 = vld [vmem:[%s1503 + $0x40] sm:$0xff]
        %v1840 = vld [vmem:[%s1503 + $0x50] sm:$0xff]
        %v1841 = vld [vmem:[%s1503 + $0x60] sm:$0xff]
        %v1842 = vld [vmem:[%s1503 + $0x70] sm:$0xff]
        %v1843 = vpack.c.bf16 %v1836, %v1835
        %v1844 = vpack.c.bf16 %v1838, %v1837
        %v1845 = vpack.c.bf16 %v1840, %v1839
        %v1846 = vpack.c.bf16 %v1842, %v1841
        %v1847 = vld [vmem:[#allocation9 + $0xc0] sm:$0xf]
        %v1848 = vld [vmem:[#allocation9 + $0xc4] sm:$0xf]
        %v1849 = vld [vmem:[#allocation9 + $0xc8] sm:$0xf]
        %v1850 = vld [vmem:[#allocation9 + $0xcc] sm:$0xf]
        %v1851 = vld [vmem:[#allocation9 + $0xd0] sm:$0xf]
        %v1852 = vld [vmem:[#allocation9 + $0xd4] sm:$0xf]
        %v1853 = vld [vmem:[#allocation9 + $0xd8] sm:$0xf]
        %v1854 = vld [vmem:[#allocation9 + $0xdc] sm:$0xf]
        %v1855 = vld [vmem:[#allocation9 + $0xe0] sm:$0xf]
        %v1856 = vld [vmem:[#allocation9 + $0xe4] sm:$0xf]
        %v1857 = vld [vmem:[#allocation9 + $0xe8] sm:$0xf]
        %v1858 = vld [vmem:[#allocation9 + $0xec] sm:$0xf]
        %v1859 = vld [vmem:[#allocation9 + $0xf0] sm:$0xf]
        %v1860 = vld [vmem:[#allocation9 + $0xf4] sm:$0xf]
        %v1861 = vld [vmem:[#allocation9 + $0xf8] sm:$0xf]
        %v1862 = vld [vmem:[#allocation9 + $0xfc] sm:$0xf]
        %v1879 = vunpack.c.l.b16 %v1847
        %v1880 = vunpack.c.l.b16 %v1848
        %v1881 = vunpack.c.l.b16 %v1849
        %v1882 = vunpack.c.l.b16 %v1850
        %v1883 = vunpack.c.l.b16 %v1851
        %v1884 = vunpack.c.l.b16 %v1852
        %v1885 = vunpack.c.l.b16 %v1853
        %v1886 = vunpack.c.l.b16 %v1854
        %v1887 = vunpack.c.l.b16 %v1855
        %v1888 = vunpack.c.l.b16 %v1856
        %v1889 = vunpack.c.l.b16 %v1857
        %v1890 = vunpack.c.l.b16 %v1858
        %v1891 = vunpack.c.l.b16 %v1859
        %v1892 = vunpack.c.l.b16 %v1860
        %v1893 = vunpack.c.l.b16 %v1861
        %v1894 = vunpack.c.l.b16 %v1862
        %v1895 = vpack.c.b16 %v1880, %v1879
        %v1896 = vpack.c.b16 %v1882, %v1881
        %v1897 = vpack.c.b16 %v1884, %v1883
        %v1898 = vpack.c.b16 %v1886, %v1885
        %v1899 = vpack.c.b16 %v1888, %v1887
        %v1900 = vpack.c.b16 %v1890, %v1889
        %v1901 = vpack.c.b16 %v1892, %v1891
        %v1902 = vpack.c.b16 %v1894, %v1893
        %1911 = vmatpush.bf16.msra.mxu0 %v1902
        %1912 = vmatpush.bf16.msra.mxu0 %v1901
        %1913 = vmatpush.bf16.msra.mxu0 %v1900
        %1914 = vmatpush.bf16.msra.mxu0 %v1899
        %1915 = vmatpush.bf16.msra.mxu0 %v1898
        %1916 = vmatpush.bf16.msra.mxu0 %v1897
        %1917 = vmatpush.bf16.msra.mxu0 %v1896
        %1918 = vmatpush.bf16.msra.mxu0 %v1895
        %1919 = vmatmul.bf16.gmra.mxu0 %v1843
        %v1920 = vpop.f32.mrf.mxu0
        %v1921 = vadd.f32 0.0, %v1920
        %v1922 = vpop.f32.mrf.mxu0
        %v1923 = vadd.f32 0.0, %v1922
        %1924 = vmatmul.bf16.gmra.mxu0 %v1844
        %v1925 = vpop.f32.mrf.mxu0
        %v1926 = vadd.f32 0.0, %v1925
        %v1927 = vpop.f32.mrf.mxu0
        %v1928 = vadd.f32 0.0, %v1927
        %1929 = vmatmul.bf16.gmra.mxu0 %v1845
        %v1930 = vpop.f32.mrf.mxu0
        %v1931 = vadd.f32 0.0, %v1930
        %v1932 = vpop.f32.mrf.mxu0
        %v1933 = vadd.f32 0.0, %v1932
        %1934 = vmatmul.bf16.gmra.mxu0 %v1846
        %v1935 = vpop.f32.mrf.mxu0
        %v1936 = vadd.f32 0.0, %v1935
        %v1937 = vpop.f32.mrf.mxu0
        %v1938 = vadd.f32 0.0, %v1937
        %1939 = vdwg.mxu0
        %v1940 = vadd.f32 %v1827, %v1921
        %v1941 = vadd.f32 %v1828, %v1923
        %v1942 = vadd.f32 %v1829, %v1926
        %v1943 = vadd.f32 %v1830, %v1928
        %v1944 = vadd.f32 %v1831, %v1931
        %v1945 = vadd.f32 %v1832, %v1933
        %v1946 = vadd.f32 %v1833, %v1936
        %v1947 = vadd.f32 %v1834, %v1938
        %v1948 = vld [vmem:[%s1503 + $0x1] sm:$0xff]
        %v1949 = vld [vmem:[%s1503 + $0x11] sm:$0xff]
        %v1950 = vld [vmem:[%s1503 + $0x21] sm:$0xff]
        %v1951 = vld [vmem:[%s1503 + $0x31] sm:$0xff]
        %v1952 = vld [vmem:[%s1503 + $0x41] sm:$0xff]
        %v1953 = vld [vmem:[%s1503 + $0x51] sm:$0xff]
        %v1954 = vld [vmem:[%s1503 + $0x61] sm:$0xff]
        %v1955 = vld [vmem:[%s1503 + $0x71] sm:$0xff]
        %v1956 = vpack.c.bf16 %v1949, %v1948
        %v1957 = vpack.c.bf16 %v1951, %v1950
        %v1958 = vpack.c.bf16 %v1953, %v1952
        %v1959 = vpack.c.bf16 %v1955, %v1954
        %v1960 = vld [vmem:[#allocation9 + $0x100] sm:$0xf]
        %v1961 = vld [vmem:[#allocation9 + $0x104] sm:$0xf]
        %v1962 = vld [vmem:[#allocation9 + $0x108] sm:$0xf]
        %v1963 = vld [vmem:[#allocation9 + $0x10c] sm:$0xf]
        %v1964 = vld [vmem:[#allocation9 + $0x110] sm:$0xf]
        %v1965 = vld [vmem:[#allocation9 + $0x114] sm:$0xf]
        %v1966 = vld [vmem:[#allocation9 + $0x118] sm:$0xf]
        %v1967 = vld [vmem:[#allocation9 + $0x11c] sm:$0xf]
        %v1968 = vld [vmem:[#allocation9 + $0x120] sm:$0xf]
        %v1969 = vld [vmem:[#allocation9 + $0x124] sm:$0xf]
        %v1970 = vld [vmem:[#allocation9 + $0x128] sm:$0xf]
        %v1971 = vld [vmem:[#allocation9 + $0x12c] sm:$0xf]
        %v1972 = vld [vmem:[#allocation9 + $0x130] sm:$0xf]
        %v1973 = vld [vmem:[#allocation9 + $0x134] sm:$0xf]
        %v1974 = vld [vmem:[#allocation9 + $0x138] sm:$0xf]
        %v1975 = vld [vmem:[#allocation9 + $0x13c] sm:$0xf]
        %v1992 = vunpack.c.l.b16 %v1960
        %v1993 = vunpack.c.l.b16 %v1961
        %v1994 = vunpack.c.l.b16 %v1962
        %v1995 = vunpack.c.l.b16 %v1963
        %v1996 = vunpack.c.l.b16 %v1964
        %v1997 = vunpack.c.l.b16 %v1965
        %v1998 = vunpack.c.l.b16 %v1966
        %v1999 = vunpack.c.l.b16 %v1967
        %v2000 = vunpack.c.l.b16 %v1968
        %v2001 = vunpack.c.l.b16 %v1969
        %v2002 = vunpack.c.l.b16 %v1970
        %v2003 = vunpack.c.l.b16 %v1971
        %v2004 = vunpack.c.l.b16 %v1972
        %v2005 = vunpack.c.l.b16 %v1973
        %v2006 = vunpack.c.l.b16 %v1974
        %v2007 = vunpack.c.l.b16 %v1975
        %v2008 = vpack.c.b16 %v1993, %v1992
        %v2009 = vpack.c.b16 %v1995, %v1994
        %v2010 = vpack.c.b16 %v1997, %v1996
        %v2011 = vpack.c.b16 %v1999, %v1998
        %v2012 = vpack.c.b16 %v2001, %v2000
        %v2013 = vpack.c.b16 %v2003, %v2002
        %v2014 = vpack.c.b16 %v2005, %v2004
        %v2015 = vpack.c.b16 %v2007, %v2006
        %2024 = vmatpush.bf16.msra.mxu0 %v2015
        %2025 = vmatpush.bf16.msra.mxu0 %v2014
        %2026 = vmatpush.bf16.msra.mxu0 %v2013
        %2027 = vmatpush.bf16.msra.mxu0 %v2012
        %2028 = vmatpush.bf16.msra.mxu0 %v2011
        %2029 = vmatpush.bf16.msra.mxu0 %v2010
        %2030 = vmatpush.bf16.msra.mxu0 %v2009
        %2031 = vmatpush.bf16.msra.mxu0 %v2008
        %2032 = vmatmul.bf16.gmra.mxu0 %v1956
        %v2033 = vpop.f32.mrf.mxu0
        %v2034 = vadd.f32 0.0, %v2033
        %v2035 = vpop.f32.mrf.mxu0
        %v2036 = vadd.f32 0.0, %v2035
        %2037 = vmatmul.bf16.gmra.mxu0 %v1957
        %v2038 = vpop.f32.mrf.mxu0
        %v2039 = vadd.f32 0.0, %v2038
        %v2040 = vpop.f32.mrf.mxu0
        %v2041 = vadd.f32 0.0, %v2040
        %2042 = vmatmul.bf16.gmra.mxu0 %v1958
        %v2043 = vpop.f32.mrf.mxu0
        %v2044 = vadd.f32 0.0, %v2043
        %v2045 = vpop.f32.mrf.mxu0
        %v2046 = vadd.f32 0.0, %v2045
        %2047 = vmatmul.bf16.gmra.mxu0 %v1959
        %v2048 = vpop.f32.mrf.mxu0
        %v2049 = vadd.f32 0.0, %v2048
        %v2050 = vpop.f32.mrf.mxu0
        %v2051 = vadd.f32 0.0, %v2050
        %2052 = vdwg.mxu0
        %v2053 = vadd.f32 %v1940, %v2034
        %v2054 = vadd.f32 %v1941, %v2036
        %v2055 = vadd.f32 %v1942, %v2039
        %v2056 = vadd.f32 %v1943, %v2041
        %v2057 = vadd.f32 %v1944, %v2044
        %v2058 = vadd.f32 %v1945, %v2046
        %v2059 = vadd.f32 %v1946, %v2049
        %v2060 = vadd.f32 %v1947, %v2051
        %v2061 = vld [vmem:[%s1503 + $0x2] sm:$0xff]
        %v2062 = vld [vmem:[%s1503 + $0x12] sm:$0xff]
        %v2063 = vld [vmem:[%s1503 + $0x22] sm:$0xff]
        %v2064 = vld [vmem:[%s1503 + $0x32] sm:$0xff]
        %v2065 = vld [vmem:[%s1503 + $0x42] sm:$0xff]
        %v2066 = vld [vmem:[%s1503 + $0x52] sm:$0xff]
        %v2067 = vld [vmem:[%s1503 + $0x62] sm:$0xff]
        %v2068 = vld [vmem:[%s1503 + $0x72] sm:$0xff]
        %v2069 = vpack.c.bf16 %v2062, %v2061
        %v2070 = vpack.c.bf16 %v2064, %v2063
        %v2071 = vpack.c.bf16 %v2066, %v2065
        %v2072 = vpack.c.bf16 %v2068, %v2067
        %v2073 = vld [vmem:[#allocation9 + $0x140] sm:$0xf]
        %v2074 = vld [vmem:[#allocation9 + $0x144] sm:$0xf]
        %v2075 = vld [vmem:[#allocation9 + $0x148] sm:$0xf]
        %v2076 = vld [vmem:[#allocation9 + $0x14c] sm:$0xf]
        %v2077 = vld [vmem:[#allocation9 + $0x150] sm:$0xf]
        %v2078 = vld [vmem:[#allocation9 + $0x154] sm:$0xf]
        %v2079 = vld [vmem:[#allocation9 + $0x158] sm:$0xf]
        %v2080 = vld [vmem:[#allocation9 + $0x15c] sm:$0xf]
        %v2081 = vld [vmem:[#allocation9 + $0x160] sm:$0xf]
        %v2082 = vld [vmem:[#allocation9 + $0x164] sm:$0xf]
        %v2083 = vld [vmem:[#allocation9 + $0x168] sm:$0xf]
        %v2084 = vld [vmem:[#allocation9 + $0x16c] sm:$0xf]
        %v2085 = vld [vmem:[#allocation9 + $0x170] sm:$0xf]
        %v2086 = vld [vmem:[#allocation9 + $0x174] sm:$0xf]
        %v2087 = vld [vmem:[#allocation9 + $0x178] sm:$0xf]
        %v2088 = vld [vmem:[#allocation9 + $0x17c] sm:$0xf]
        %v2105 = vunpack.c.l.b16 %v2073
        %v2106 = vunpack.c.l.b16 %v2074
        %v2107 = vunpack.c.l.b16 %v2075
        %v2108 = vunpack.c.l.b16 %v2076
        %v2109 = vunpack.c.l.b16 %v2077
        %v2110 = vunpack.c.l.b16 %v2078
        %v2111 = vunpack.c.l.b16 %v2079
        %v2112 = vunpack.c.l.b16 %v2080
        %v2113 = vunpack.c.l.b16 %v2081
        %v2114 = vunpack.c.l.b16 %v2082
        %v2115 = vunpack.c.l.b16 %v2083
        %v2116 = vunpack.c.l.b16 %v2084
        %v2117 = vunpack.c.l.b16 %v2085
        %v2118 = vunpack.c.l.b16 %v2086
        %v2119 = vunpack.c.l.b16 %v2087
        %v2120 = vunpack.c.l.b16 %v2088
        %v2121 = vpack.c.b16 %v2106, %v2105
        %v2122 = vpack.c.b16 %v2108, %v2107
        %v2123 = vpack.c.b16 %v2110, %v2109
        %v2124 = vpack.c.b16 %v2112, %v2111
        %v2125 = vpack.c.b16 %v2114, %v2113
        %v2126 = vpack.c.b16 %v2116, %v2115
        %v2127 = vpack.c.b16 %v2118, %v2117
        %v2128 = vpack.c.b16 %v2120, %v2119
        %2137 = vmatpush.bf16.msra.mxu0 %v2128
        %2138 = vmatpush.bf16.msra.mxu0 %v2127
        %2139 = vmatpush.bf16.msra.mxu0 %v2126
        %2140 = vmatpush.bf16.msra.mxu0 %v2125
        %2141 = vmatpush.bf16.msra.mxu0 %v2124
        %2142 = vmatpush.bf16.msra.mxu0 %v2123
        %2143 = vmatpush.bf16.msra.mxu0 %v2122
        %2144 = vmatpush.bf16.msra.mxu0 %v2121
        %2145 = vmatmul.bf16.gmra.mxu0 %v2069
        %v2146 = vpop.f32.mrf.mxu0
        %v2147 = vadd.f32 0.0, %v2146
        %v2148 = vpop.f32.mrf.mxu0
        %v2149 = vadd.f32 0.0, %v2148
        %2150 = vmatmul.bf16.gmra.mxu0 %v2070
        %v2151 = vpop.f32.mrf.mxu0
        %v2152 = vadd.f32 0.0, %v2151
        %v2153 = vpop.f32.mrf.mxu0
        %v2154 = vadd.f32 0.0, %v2153
        %2155 = vmatmul.bf16.gmra.mxu0 %v2071
        %v2156 = vpop.f32.mrf.mxu0
        %v2157 = vadd.f32 0.0, %v2156
        %v2158 = vpop.f32.mrf.mxu0
        %v2159 = vadd.f32 0.0, %v2158
        %2160 = vmatmul.bf16.gmra.mxu0 %v2072
        %v2161 = vpop.f32.mrf.mxu0
        %v2162 = vadd.f32 0.0, %v2161
        %v2163 = vpop.f32.mrf.mxu0
        %v2164 = vadd.f32 0.0, %v2163
        %2165 = vdwg.mxu0
        %v2166 = vadd.f32 %v2053, %v2147
        %v2167 = vadd.f32 %v2054, %v2149
        %v2168 = vadd.f32 %v2055, %v2152
        %v2169 = vadd.f32 %v2056, %v2154
        %v2170 = vadd.f32 %v2057, %v2157
        %v2171 = vadd.f32 %v2058, %v2159
        %v2172 = vadd.f32 %v2059, %v2162
        %v2173 = vadd.f32 %v2060, %v2164
        %s2174 = scalar_lea.vmem [#allocation2], 32
        %v2175 = vld [vmem:[%s2174] sm:$0xff]
        %v2176 = vld [vmem:[%s2174 + $0x10] sm:$0xff]
        %v2177 = vld [vmem:[%s2174 + $0x20] sm:$0xff]
        %v2178 = vld [vmem:[%s2174 + $0x30] sm:$0xff]
        %v2179 = vld [vmem:[%s2174 + $0x40] sm:$0xff]
        %v2180 = vld [vmem:[%s2174 + $0x50] sm:$0xff]
        %v2181 = vld [vmem:[%s2174 + $0x60] sm:$0xff]
        %v2182 = vld [vmem:[%s2174 + $0x70] sm:$0xff]
        %v2183 = vpack.c.bf16 %v2176, %v2175
        %v2184 = vpack.c.bf16 %v2178, %v2177
        %v2185 = vpack.c.bf16 %v2180, %v2179
        %v2186 = vpack.c.bf16 %v2182, %v2181
        %v2187 = vld [vmem:[#allocation9 + $0x180] sm:$0xf]
        %v2188 = vld [vmem:[#allocation9 + $0x184] sm:$0xf]
        %v2189 = vld [vmem:[#allocation9 + $0x188] sm:$0xf]
        %v2190 = vld [vmem:[#allocation9 + $0x18c] sm:$0xf]
        %v2191 = vld [vmem:[#allocation9 + $0x190] sm:$0xf]
        %v2192 = vld [vmem:[#allocation9 + $0x194] sm:$0xf]
        %v2193 = vld [vmem:[#allocation9 + $0x198] sm:$0xf]
        %v2194 = vld [vmem:[#allocation9 + $0x19c] sm:$0xf]
        %v2195 = vld [vmem:[#allocation9 + $0x1a0] sm:$0xf]
        %v2196 = vld [vmem:[#allocation9 + $0x1a4] sm:$0xf]
        %v2197 = vld [vmem:[#allocation9 + $0x1a8] sm:$0xf]
        %v2198 = vld [vmem:[#allocation9 + $0x1ac] sm:$0xf]
        %v2199 = vld [vmem:[#allocation9 + $0x1b0] sm:$0xf]
        %v2200 = vld [vmem:[#allocation9 + $0x1b4] sm:$0xf]
        %v2201 = vld [vmem:[#allocation9 + $0x1b8] sm:$0xf]
        %v2202 = vld [vmem:[#allocation9 + $0x1bc] sm:$0xf]
        %v2219 = vunpack.c.l.b16 %v2187
        %v2220 = vunpack.c.l.b16 %v2188
        %v2221 = vunpack.c.l.b16 %v2189
        %v2222 = vunpack.c.l.b16 %v2190
        %v2223 = vunpack.c.l.b16 %v2191
        %v2224 = vunpack.c.l.b16 %v2192
        %v2225 = vunpack.c.l.b16 %v2193
        %v2226 = vunpack.c.l.b16 %v2194
        %v2227 = vunpack.c.l.b16 %v2195
        %v2228 = vunpack.c.l.b16 %v2196
        %v2229 = vunpack.c.l.b16 %v2197
        %v2230 = vunpack.c.l.b16 %v2198
        %v2231 = vunpack.c.l.b16 %v2199
        %v2232 = vunpack.c.l.b16 %v2200
        %v2233 = vunpack.c.l.b16 %v2201
        %v2234 = vunpack.c.l.b16 %v2202
        %v2235 = vpack.c.b16 %v2220, %v2219
        %v2236 = vpack.c.b16 %v2222, %v2221
        %v2237 = vpack.c.b16 %v2224, %v2223
        %v2238 = vpack.c.b16 %v2226, %v2225
        %v2239 = vpack.c.b16 %v2228, %v2227
        %v2240 = vpack.c.b16 %v2230, %v2229
        %v2241 = vpack.c.b16 %v2232, %v2231
        %v2242 = vpack.c.b16 %v2234, %v2233
        %2251 = vmatpush.bf16.msra.mxu0 %v2242
        %2252 = vmatpush.bf16.msra.mxu0 %v2241
        %2253 = vmatpush.bf16.msra.mxu0 %v2240
        %2254 = vmatpush.bf16.msra.mxu0 %v2239
        %2255 = vmatpush.bf16.msra.mxu0 %v2238
        %2256 = vmatpush.bf16.msra.mxu0 %v2237
        %2257 = vmatpush.bf16.msra.mxu0 %v2236
        %2258 = vmatpush.bf16.msra.mxu0 %v2235
        %2259 = vmatmul.bf16.gmra.mxu0 %v2183
        %v2260 = vpop.f32.mrf.mxu0
        %v2261 = vadd.f32 0.0, %v2260
        %v2262 = vpop.f32.mrf.mxu0
        %v2263 = vadd.f32 0.0, %v2262
        %2264 = vmatmul.bf16.gmra.mxu0 %v2184
        %v2265 = vpop.f32.mrf.mxu0
        %v2266 = vadd.f32 0.0, %v2265
        %v2267 = vpop.f32.mrf.mxu0
        %v2268 = vadd.f32 0.0, %v2267
        %2269 = vmatmul.bf16.gmra.mxu0 %v2185
        %v2270 = vpop.f32.mrf.mxu0
        %v2271 = vadd.f32 0.0, %v2270
        %v2272 = vpop.f32.mrf.mxu0
        %v2273 = vadd.f32 0.0, %v2272
        %2274 = vmatmul.bf16.gmra.mxu0 %v2186
        %v2275 = vpop.f32.mrf.mxu0
        %v2276 = vadd.f32 0.0, %v2275
        %v2277 = vpop.f32.mrf.mxu0
        %v2278 = vadd.f32 0.0, %v2277
        %2279 = vdwg.mxu0
        %v2280 = vadd.f32 %v2166, %v2261
        %v2281 = vadd.f32 %v2167, %v2263
        %v2282 = vadd.f32 %v2168, %v2266
        %v2283 = vadd.f32 %v2169, %v2268
        %v2284 = vadd.f32 %v2170, %v2271
        %v2285 = vadd.f32 %v2171, %v2273
        %v2286 = vadd.f32 %v2172, %v2276
        %v2287 = vadd.f32 %v2173, %v2278
        %v2288 = vld [vmem:[%s2174 + $0x1] sm:$0xff]
        %v2289 = vld [vmem:[%s2174 + $0x11] sm:$0xff]
        %v2290 = vld [vmem:[%s2174 + $0x21] sm:$0xff]
        %v2291 = vld [vmem:[%s2174 + $0x31] sm:$0xff]
        %v2292 = vld [vmem:[%s2174 + $0x41] sm:$0xff]
        %v2293 = vld [vmem:[%s2174 + $0x51] sm:$0xff]
        %v2294 = vld [vmem:[%s2174 + $0x61] sm:$0xff]
        %v2295 = vld [vmem:[%s2174 + $0x71] sm:$0xff]
        %v2296 = vpack.c.bf16 %v2289, %v2288
        %v2297 = vpack.c.bf16 %v2291, %v2290
        %v2298 = vpack.c.bf16 %v2293, %v2292
        %v2299 = vpack.c.bf16 %v2295, %v2294
        %v2300 = vld [vmem:[#allocation9 + $0x1c0] sm:$0xf]
        %v2301 = vld [vmem:[#allocation9 + $0x1c4] sm:$0xf]
        %v2302 = vld [vmem:[#allocation9 + $0x1c8] sm:$0xf]
        %v2303 = vld [vmem:[#allocation9 + $0x1cc] sm:$0xf]
        %v2304 = vld [vmem:[#allocation9 + $0x1d0] sm:$0xf]
        %v2305 = vld [vmem:[#allocation9 + $0x1d4] sm:$0xf]
        %v2306 = vld [vmem:[#allocation9 + $0x1d8] sm:$0xf]
        %v2307 = vld [vmem:[#allocation9 + $0x1dc] sm:$0xf]
        %v2308 = vld [vmem:[#allocation9 + $0x1e0] sm:$0xf]
        %v2309 = vld [vmem:[#allocation9 + $0x1e4] sm:$0xf]
        %v2310 = vld [vmem:[#allocation9 + $0x1e8] sm:$0xf]
        %v2311 = vld [vmem:[#allocation9 + $0x1ec] sm:$0xf]
        %v2312 = vld [vmem:[#allocation9 + $0x1f0] sm:$0xf]
        %v2313 = vld [vmem:[#allocation9 + $0x1f4] sm:$0xf]
        %v2314 = vld [vmem:[#allocation9 + $0x1f8] sm:$0xf]
        %v2315 = vld [vmem:[#allocation9 + $0x1fc] sm:$0xf]
        %v2332 = vunpack.c.l.b16 %v2300
        %v2333 = vunpack.c.l.b16 %v2301
        %v2334 = vunpack.c.l.b16 %v2302
        %v2335 = vunpack.c.l.b16 %v2303
        %v2336 = vunpack.c.l.b16 %v2304
        %v2337 = vunpack.c.l.b16 %v2305
        %v2338 = vunpack.c.l.b16 %v2306
        %v2339 = vunpack.c.l.b16 %v2307
        %v2340 = vunpack.c.l.b16 %v2308
        %v2341 = vunpack.c.l.b16 %v2309
        %v2342 = vunpack.c.l.b16 %v2310
        %v2343 = vunpack.c.l.b16 %v2311
        %v2344 = vunpack.c.l.b16 %v2312
        %v2345 = vunpack.c.l.b16 %v2313
        %v2346 = vunpack.c.l.b16 %v2314
        %v2347 = vunpack.c.l.b16 %v2315
        %v2348 = vpack.c.b16 %v2333, %v2332
        %v2349 = vpack.c.b16 %v2335, %v2334
        %v2350 = vpack.c.b16 %v2337, %v2336
        %v2351 = vpack.c.b16 %v2339, %v2338
        %v2352 = vpack.c.b16 %v2341, %v2340
        %v2353 = vpack.c.b16 %v2343, %v2342
        %v2354 = vpack.c.b16 %v2345, %v2344
        %v2355 = vpack.c.b16 %v2347, %v2346
        %2364 = vmatpush.bf16.msra.mxu0 %v2355
        %2365 = vmatpush.bf16.msra.mxu0 %v2354
        %2366 = vmatpush.bf16.msra.mxu0 %v2353
        %2367 = vmatpush.bf16.msra.mxu0 %v2352
        %2368 = vmatpush.bf16.msra.mxu0 %v2351
        %2369 = vmatpush.bf16.msra.mxu0 %v2350
        %2370 = vmatpush.bf16.msra.mxu0 %v2349
        %2371 = vmatpush.bf16.msra.mxu0 %v2348
        %2372 = vmatmul.bf16.gmra.mxu0 %v2296
        %v2373 = vpop.f32.mrf.mxu0
        %v2374 = vadd.f32 0.0, %v2373
        %v2375 = vpop.f32.mrf.mxu0
        %v2376 = vadd.f32 0.0, %v2375
        %2377 = vmatmul.bf16.gmra.mxu0 %v2297
        %v2378 = vpop.f32.mrf.mxu0
        %v2379 = vadd.f32 0.0, %v2378
        %v2380 = vpop.f32.mrf.mxu0
        %v2381 = vadd.f32 0.0, %v2380
        %2382 = vmatmul.bf16.gmra.mxu0 %v2298
        %v2383 = vpop.f32.mrf.mxu0
        %v2384 = vadd.f32 0.0, %v2383
        %v2385 = vpop.f32.mrf.mxu0
        %v2386 = vadd.f32 0.0, %v2385
        %2387 = vmatmul.bf16.gmra.mxu0 %v2299
        %v2388 = vpop.f32.mrf.mxu0
        %v2389 = vadd.f32 0.0, %v2388
        %v2390 = vpop.f32.mrf.mxu0
        %v2391 = vadd.f32 0.0, %v2390
        %2392 = vdwg.mxu0
        %v2393 = vadd.f32 %v2280, %v2374
        %v2394 = vadd.f32 %v2281, %v2376
        %v2395 = vadd.f32 %v2282, %v2379
        %v2396 = vadd.f32 %v2283, %v2381
        %v2397 = vadd.f32 %v2284, %v2384
        %v2398 = vadd.f32 %v2285, %v2386
        %v2399 = vadd.f32 %v2286, %v2389
        %v2400 = vadd.f32 %v2287, %v2391
        %v2401 = vld [vmem:[%s2174 + $0x2] sm:$0xff]
        %v2402 = vld [vmem:[%s2174 + $0x12] sm:$0xff]
        %v2403 = vld [vmem:[%s2174 + $0x22] sm:$0xff]
        %v2404 = vld [vmem:[%s2174 + $0x32] sm:$0xff]
        %v2405 = vld [vmem:[%s2174 + $0x42] sm:$0xff]
        %v2406 = vld [vmem:[%s2174 + $0x52] sm:$0xff]
        %v2407 = vld [vmem:[%s2174 + $0x62] sm:$0xff]
        %v2408 = vld [vmem:[%s2174 + $0x72] sm:$0xff]
        %v2409 = vpack.c.bf16 %v2402, %v2401
        %v2410 = vpack.c.bf16 %v2404, %v2403
        %v2411 = vpack.c.bf16 %v2406, %v2405
        %v2412 = vpack.c.bf16 %v2408, %v2407
        %v2413 = vld [vmem:[#allocation9 + $0x200] sm:$0xf]
        %v2414 = vld [vmem:[#allocation9 + $0x204] sm:$0xf]
        %v2415 = vld [vmem:[#allocation9 + $0x208] sm:$0xf]
        %v2416 = vld [vmem:[#allocation9 + $0x20c] sm:$0xf]
        %v2417 = vld [vmem:[#allocation9 + $0x210] sm:$0xf]
        %v2418 = vld [vmem:[#allocation9 + $0x214] sm:$0xf]
        %v2419 = vld [vmem:[#allocation9 + $0x218] sm:$0xf]
        %v2420 = vld [vmem:[#allocation9 + $0x21c] sm:$0xf]
        %v2421 = vld [vmem:[#allocation9 + $0x220] sm:$0xf]
        %v2422 = vld [vmem:[#allocation9 + $0x224] sm:$0xf]
        %v2423 = vld [vmem:[#allocation9 + $0x228] sm:$0xf]
        %v2424 = vld [vmem:[#allocation9 + $0x22c] sm:$0xf]
        %v2425 = vld [vmem:[#allocation9 + $0x230] sm:$0xf]
        %v2426 = vld [vmem:[#allocation9 + $0x234] sm:$0xf]
        %v2427 = vld [vmem:[#allocation9 + $0x238] sm:$0xf]
        %v2428 = vld [vmem:[#allocation9 + $0x23c] sm:$0xf]
        %v2445 = vunpack.c.l.b16 %v2413
        %v2446 = vunpack.c.l.b16 %v2414
        %v2447 = vunpack.c.l.b16 %v2415
        %v2448 = vunpack.c.l.b16 %v2416
        %v2449 = vunpack.c.l.b16 %v2417
        %v2450 = vunpack.c.l.b16 %v2418
        %v2451 = vunpack.c.l.b16 %v2419
        %v2452 = vunpack.c.l.b16 %v2420
        %v2453 = vunpack.c.l.b16 %v2421
        %v2454 = vunpack.c.l.b16 %v2422
        %v2455 = vunpack.c.l.b16 %v2423
        %v2456 = vunpack.c.l.b16 %v2424
        %v2457 = vunpack.c.l.b16 %v2425
        %v2458 = vunpack.c.l.b16 %v2426
        %v2459 = vunpack.c.l.b16 %v2427
        %v2460 = vunpack.c.l.b16 %v2428
        %v2461 = vpack.c.b16 %v2446, %v2445
        %v2462 = vpack.c.b16 %v2448, %v2447
        %v2463 = vpack.c.b16 %v2450, %v2449
        %v2464 = vpack.c.b16 %v2452, %v2451
        %v2465 = vpack.c.b16 %v2454, %v2453
        %v2466 = vpack.c.b16 %v2456, %v2455
        %v2467 = vpack.c.b16 %v2458, %v2457
        %v2468 = vpack.c.b16 %v2460, %v2459
        %2477 = vmatpush.bf16.msra.mxu0 %v2468
        %2478 = vmatpush.bf16.msra.mxu0 %v2467
        %2479 = vmatpush.bf16.msra.mxu0 %v2466
        %2480 = vmatpush.bf16.msra.mxu0 %v2465
        %2481 = vmatpush.bf16.msra.mxu0 %v2464
        %2482 = vmatpush.bf16.msra.mxu0 %v2463
        %2483 = vmatpush.bf16.msra.mxu0 %v2462
        %2484 = vmatpush.bf16.msra.mxu0 %v2461
        %2485 = vmatmul.bf16.gmra.mxu0 %v2409
        %v2486 = vpop.f32.mrf.mxu0
        %v2487 = vadd.f32 0.0, %v2486
        %v2488 = vpop.f32.mrf.mxu0
        %v2489 = vadd.f32 0.0, %v2488
        %2490 = vmatmul.bf16.gmra.mxu0 %v2410
        %v2491 = vpop.f32.mrf.mxu0
        %v2492 = vadd.f32 0.0, %v2491
        %v2493 = vpop.f32.mrf.mxu0
        %v2494 = vadd.f32 0.0, %v2493
        %2495 = vmatmul.bf16.gmra.mxu0 %v2411
        %v2496 = vpop.f32.mrf.mxu0
        %v2497 = vadd.f32 0.0, %v2496
        %v2498 = vpop.f32.mrf.mxu0
        %v2499 = vadd.f32 0.0, %v2498
        %2500 = vmatmul.bf16.gmra.mxu0 %v2412
        %v2501 = vpop.f32.mrf.mxu0
        %v2502 = vadd.f32 0.0, %v2501
        %v2503 = vpop.f32.mrf.mxu0
        %v2504 = vadd.f32 0.0, %v2503
        %2505 = vdwg.mxu0
        %v2506 = vadd.f32 %v2393, %v2487
        %v2507 = vadd.f32 %v2394, %v2489
        %v2508 = vadd.f32 %v2395, %v2492
        %v2509 = vadd.f32 %v2396, %v2494
        %v2510 = vadd.f32 %v2397, %v2497
        %v2511 = vadd.f32 %v2398, %v2499
        %v2512 = vadd.f32 %v2399, %v2502
        %v2513 = vadd.f32 %v2400, %v2504
        %v2514 = vld [vmem:[%s4] sm:$0x1]
        %v2515 = vperm.slane %v2514, 0
        %v2516 = vmul.f32 %v2506, %v2515
        %v2517 = vmul.f32 %v2507, %v2515
        %v2518 = vmul.f32 %v2508, %v2515
        %v2519 = vmul.f32 %v2509, %v2515
        %v2520 = vmul.f32 %v2510, %v2515
        %v2521 = vmul.f32 %v2511, %v2515
        %v2522 = vmul.f32 %v2512, %v2515
        %v2523 = vmul.f32 %v2513, %v2515
        %v2524 = vld [vmem:[%s4 + $0x1] sm:$0x1]
        %v2525 = vperm.slane %v2524, 0
        %v2526 = vadd.f32 %v2516, %v2525
        %v2527 = vadd.f32 %v2517, %v2525
        %v2528 = vadd.f32 %v2518, %v2525
        %v2529 = vadd.f32 %v2519, %v2525
        %v2530 = vadd.f32 %v2520, %v2525
        %v2531 = vadd.f32 %v2521, %v2525
        %v2532 = vadd.f32 %v2522, %v2525
        %v2533 = vadd.f32 %v2523, %v2525
        %v2534 = vadd.f32 %v2526, %v1442
        %v2535 = vadd.f32 %v2527, %v1443
        %v2536 = vadd.f32 %v2528, %v1444
        %v2537 = vadd.f32 %v2529, %v1445
        %v2538 = vadd.f32 %v2530, %v1446
        %v2539 = vadd.f32 %v2531, %v1447
        %v2540 = vadd.f32 %v2532, %v1448
        %v2541 = vadd.f32 %v2533, %v1449
        %v2542 = vmax.f32 %v2534, 0.0
        %v2543 = vmax.f32 %v2535, 0.0
        %v2544 = vmax.f32 %v2536, 0.0
        %v2545 = vmax.f32 %v2537, 0.0
        %v2546 = vmax.f32 %v2538, 0.0
        %v2547 = vmax.f32 %v2539, 0.0
        %v2548 = vmax.f32 %v2540, 0.0
        %v2549 = vmax.f32 %v2541, 0.0
        %2550 = vst [vmem:[%s362] sm:$0xff] %v2542
        %2551 = vst [vmem:[%s362 + $0x8] sm:$0xff] %v2543
        %2552 = vst [vmem:[%s362 + $0x10] sm:$0xff] %v2544
        %2553 = vst [vmem:[%s362 + $0x18] sm:$0xff] %v2545
        %2554 = vst [vmem:[%s362 + $0x20] sm:$0xff] %v2546
        %2555 = vst [vmem:[%s362 + $0x28] sm:$0xff] %v2547
        %2556 = vst [vmem:[%s362 + $0x30] sm:$0xff] %v2548
        %2557 = vst [vmem:[%s362 + $0x38] sm:$0xff] %v2549
        %s2558 = sand.u32 %s186, 1
        %s2559 = scalar_lea.sflag [#allocation5], %s2558
        %s2560 = sand.u32 %s186, 1
        %s2561 = smul.addr %s2560, 64
        %s2562 = scalar_lea.vmem [#allocation12], %s2561
        // Predicated region
        $region69: #{tpu_custom_call.1} parent=47 // pred_check
          %p2563 = pneg %p196
        $region70: #{tpu_custom_call.1} parent=47 // pred_check_branch
          %2565 = sbr.rel (%p2563) target = $region72
        $region71: #{tpu_custom_call.1} parent=47 // pred_region
          %2567 = vsyncadd %s2559, 0
          %s2568 = smul.addr %s26, 8
          %s2569 = smul.addr %s2568, 8
          %s2570 = scalar_lea.hbm %s7, %s2569
          %s2571 = sshll.u32 %s2562, 4
          %s2572 = int_to_ptr.vmem [resolvable:$true] %s2571
          %s2573 = sshll.u32 %s2570, 4
          %s2574 = int_to_ptr.hbm [resolvable:$true] %s2573
          %2579 = dma.vmem_to_hbm [thread:$0]  %s2572, 1024, %s2574, %s2559, 128, 128, 8
        $region72: #{tpu_custom_call.1} parent=47 // pred_fallthru
          _
      $region48: #{tpu_custom_call.1} parent=5 // pred_fallthru
        _
      %p2580 = scmp.le.s32.totalorder 2, %s21
      // Predicated region
      $region73: #{tpu_custom_call.1} parent=5 // pred_check
        %p2581 = pneg %p2580
      $region74: #{tpu_custom_call.1} parent=5 // pred_check_branch
        %2583 = sbr.rel (%p2581) target = $region76
      $region75: #{tpu_custom_call.1} parent=5 // pred_region
        %s2584 = ssub.s32 %s21, 2
        // Predicated region
        $region77: #{tpu_custom_call.1} parent=75 // pred_check
          %p2585 = pneg %p202
        $region78: #{tpu_custom_call.1} parent=75 // pred_check_branch
          %2587 = sbr.rel (%p2585) target = $region80
        $region79: #{tpu_custom_call.1} parent=75 // pred_region
          %s2588 = sand.u32 %s187, 1
          %s2589 = scalar_lea.sflag [#allocation5], %s2588
          %s2590 = sand.u32 %s187, 1
          %s2591 = smul.addr %s2590, 64
          %s2592 = scalar_lea.vmem [#allocation12], %s2591
          %2594 = dma.done %s2589, 1024
        $region80: #{tpu_custom_call.1} parent=75 // pred_fallthru
          _
      $region76: #{tpu_custom_call.1} parent=5 // pred_fallthru
        _
    $region6: #{tpu_custom_call.1} parent=1 // loop_footer
      %s25 = sadd.s32 1, %s21
    $region7: #{tpu_custom_call.1} parent=1 // loop_footer_branch
      %20 = sbr.rel target = $region3
    $region8: #{tpu_custom_call.1} parent=1 // loop_exit
      _
    %2595 = vsyncpa [#allocation4], 1
    %s2596 = scalar_lea.sflag [#allocation4], 1
    %2597 = vsyncpa %s2596, 1
    %2598 = vsyncpa [#allocation7], 1
    %2599 = vsyncpa [#allocation10], 1
    %2600 = vsyncpa [#allocation5], 1
    %s2601 = scalar_lea.sflag [#allocation5], 1
    %2602 = vsyncpa %s2601, 1

</llo_original>
